<compile_context>
chip_gen: v7x
topology: tpu7x:2x2x1
jax: 0.10.0
libtpu: 0.0.40
codegen_flags: <defaults>
</compile_context>

<pallas_src>
import jax
import jax.numpy as jnp
from jax import lax
from jax.experimental import pallas as pl
from jax.experimental.pallas import tpu as pltpu
import numpy as np

ITEM_INPUT_DIM = 32
ITEM_HIDDIM = 32
NUM_FACTORS = 16          # == user_hiddim (required by the shape assert in forward)
USER_HIDDIM = NUM_FACTORS
BATCH = 4
SEQ = 8


# ----------------------------------------------------------------------------
# Weight packing (done once, at init time).
#   Slab layout (rows, all pieces zero-padded to width 4H):
#     [W1 (D) | W2 (DH) | W3_item (DH) | W3·Wih_scaled (DH) | Whh_scaled (H)
#      | b1 | b2 | b3 | fused_gate_bias | zero-pad to multiple of 8]
#   i/f/o columns of the gate projection / recurrence / bias are pre-scaled by
#   0.5 so sigmoid(x) == 0.5*tanh(x_half)+0.5 inside the kernel.
# ----------------------------------------------------------------------------
def pack_params(params):
    w1t, b1, w2t, b2, w3t, b3 = params["mlp"]
    wih_t, whh_t, lstm_b = params["wih_t"], params["whh_t"], params["lstm_b"]
    D, DH = w1t.shape
    H = whh_t.shape[0]
    W = 4 * H

    col = jnp.arange(W)
    is_g = (col >= 2 * H) & (col < 3 * H)
    col_scale = jnp.where(is_g, 1.0, 0.5).astype(jnp.float32)   # halve i/f/o cols

    w3wih = (w3t @ wih_t) * col_scale[None, :]                  # (DH, 4H)
    whh_s = whh_t * col_scale[None, :]                          # (H, 4H)
    bg = (b3 @ wih_t + lstm_b) * col_scale[None, :]             # (1, 4H)

    def padc(a):
        return jnp.pad(a, ((0, 0), (0, W - a.shape[1])))

    pieces = [padc(w1t), padc(w2t), padc(w3t), w3wih, whh_s,
              padc(b1), padc(b2), padc(b3), bg]
    offs = []
    r = 0
    for p in pieces:
        offs.append(r)
        r += int(p.shape[0])
    pad_rows = (-r) % 8
    if pad_rows:
        pieces.append(jnp.zeros((pad_rows, W), jnp.float32))
    w_slab = jnp.concatenate(pieces, axis=0)

    return {
        "w_slab": w_slab,
        "dims": {"D": int(D), "DH": int(DH), "H": int(H)},
        "offs": {"w1": offs[0], "w2": offs[1], "w3": offs[2], "gw": offs[3],
                 "whh": offs[4], "b1": offs[5], "b2": offs[6], "b3": offs[7],
                 "bg": offs[8]},
    }


# ----------------------------------------------------------------------------
# Fused kernel: shared MLP (layers 1-2 on all rows, layer 3 on item rows,
# fused layer3·Wih on user rows) -> unrolled LSTM -> lane-dense diag score.
# ----------------------------------------------------------------------------
def _build_kernel(B, S, n_item_rows, dims, offs):
    D, DH, H = dims["D"], dims["DH"], dims["H"]
    o_w1, o_w2, o_w3 = offs["w1"], offs["w2"], offs["w3"]
    o_gw, o_whh = offs["gw"], offs["whh"]
    o_b1, o_b2, o_b3, o_bg = offs["b1"], offs["b2"], offs["b3"], offs["bg"]

    def kernel(x_ref, w_ref, o_ref):
        f32 = jnp.float32
        x = x_ref[...]                                           # (rows_pad, D)

        w1 = w_ref[o_w1:o_w1 + D, 0:DH]                          # (D, DH)
        w2 = w_ref[o_w2:o_w2 + DH, 0:DH]                         # (DH, DH)
        w3 = w_ref[o_w3:o_w3 + DH, 0:H]                          # (DH, H)
        gw = w_ref[o_gw:o_gw + DH, :]                            # (DH, 4H) scaled
        whh = w_ref[o_whh:o_whh + H, :]                          # (H, 4H) scaled
        b1 = w_ref[o_b1:o_b1 + 1, 0:DH]
        b2 = w_ref[o_b2:o_b2 + 1, 0:DH]
        b3 = w_ref[o_b3:o_b3 + 1, 0:H]
        bg = w_ref[o_bg:o_bg + 1, :]                             # fused, scaled

        # --- shared MLP layers 1-2 on the padded [user ; item] row block ----
        h1 = jnp.maximum(jnp.dot(x, w1, preferred_element_type=f32) + b1, 0.0)
        h2 = jnp.maximum(jnp.dot(h1, w2, preferred_element_type=f32) + b2, 0.0)

        h2_user = h2[0:B * S, :]                                 # time-major rows
        h2_item = h2[B * S:B * S + n_item_rows, :]               # aligned 8-row block

        # Layer 3 only on item rows; user rows go straight to the (fused,
        # sigmoid-prescaled) gate projection.
        item_emb = jnp.dot(h2_item, w3, preferred_element_type=f32) + b3   # (8, H)
        gates_x = jnp.dot(h2_user, gw, preferred_element_type=f32) + bg    # (B*S, 4H)

        # sigmoid(x) = 0.5*tanh(x/2)+0.5 ; the /2 is already folded into the
        # i/f/o columns of gw/whh/bg, so one tanh + one affine per step.
        lane = lax.broadcasted_iota(jnp.int32, (B, 4 * H), 1)
        is_g = (lane >= 2 * H) & (lane < 3 * H)
        scale = jnp.where(is_g, 1.0, 0.5)
        shift = jnp.where(is_g, 0.0, 0.5)

        h = jnp.zeros((B, H), f32)
        c = jnp.zeros((B, H), f32)
        for t in range(S):                                       # static unroll
            g = gates_x[t * B:(t + 1) * B, :] + jnp.dot(
                h, whh, preferred_element_type=f32)
            act = jnp.tanh(g) * scale + shift
            i_g = act[:, 0:H]
            f_g = act[:, H:2 * H]
            g_g = act[:, 2 * H:3 * H]
            o_g = act[:, 3 * H:]
            c = f_g * c + i_g * g_g
            h = o_g * jnp.tanh(c)

        # diag(U @ I^T) == rowwise dot; emit lane-dense (1, B).
        score = jnp.sum(h * item_emb[0:B, :], axis=-1)           # (B,)
        o_ref[...] = score[None, :]

    return kernel


# ----------------------------------------------------------------------------
# ContentRecommender.forward — single pallas_call, 2 VMEM-resident operands.
# ----------------------------------------------------------------------------
def content_recommender_forward(user_item_inputs, item_inputs, batch_size, packed):
    B = int(batch_size)
    BS, D = user_item_inputs.shape
    S = BS // B

    # Pack activations in the wrapper: user rows time-major, item rows,
    # zero-pad the row count to a multiple of 8 sublanes.
    rows = BS + B
    rows_pad = -(-rows // 8) * 8
    n_item_rows = rows_pad - BS
    user_tm = user_item_inputs.reshape(B, S, D).transpose(1, 0, 2).reshape(BS, D)
    x_packed = jnp.concatenate(
        [user_tm, item_inputs,
         jnp.zeros((rows_pad - rows, D), user_item_inputs.dtype)], axis=0)

    kernel = _build_kernel(B, S, n_item_rows, packed["dims"], packed["offs"])
    out = pl.pallas_call(
        kernel,
        out_shape=jax.ShapeDtypeStruct((1, B), jnp.float32),
        in_specs=[pl.BlockSpec(memory_space=pltpu.MemorySpace.VMEM),
                  pl.BlockSpec(memory_space=pltpu.MemorySpace.VMEM)],
        out_specs=pl.BlockSpec(memory_space=pltpu.MemorySpace.VMEM),
    )(x_packed, packed["w_slab"])
    return out[0]                                                # (B,)


# ----------------------------------------------------------------------------
# Pure-JAX reference (mirrors the PyTorch module exactly) for validation.
# ----------------------------------------------------------------------------
def reference_forward(user_item_inputs, item_inputs, batch_size, params):
    w1t, b1, w2t, b2, w3t, b3 = params["mlp"]

    def mlp(x):
        h1 = jax.nn.relu(x @ w1t + b1)
        h2 = jax.nn.relu(h1 @ w2t + b2)
        return h2 @ w3t + b3

    user_inputs = mlp(user_item_inputs).reshape(batch_size, -1, NUM_FACTORS)
    item_embeddings = mlp(item_inputs)

    wih_t, whh_t, b = params["wih_t"], params["whh_t"], params["lstm_b"]
    H = USER_HIDDIM
    B = batch_size

    def step(carry, x_t):
        h, c = carry
        gates = x_t @ wih_t + h @ whh_t + b[0]
        i_g = jax.nn.sigmoid(gates[:, 0 * H:1 * H])
        f_g = jax.nn.sigmoid(gates[:, 1 * H:2 * H])
        g_g = jnp.tanh(gates[:, 2 * H:3 * H])
        o_g = jax.nn.sigmoid(gates[:, 3 * H:4 * H])
        c = f_g * c + i_g * g_g
        h = o_g * jnp.tanh(c)
        return (h, c), h

    x_tbf = jnp.transpose(user_inputs, (1, 0, 2))
    (h_last, _), _ = lax.scan(step, (jnp.zeros((B, H)), jnp.zeros((B, H))), x_tbf)
    user_embeddings = h_last
    return jnp.diagonal(user_embeddings @ item_embeddings.T)


# ----------------------------------------------------------------------------
# Deterministic parameter init (PyTorch shapes, stored pre-transposed).
# ----------------------------------------------------------------------------
def init_params(key):
    ks = jax.random.split(key, 10)
    s = 0.1
    # item_model (PyTorch Linear stores (out, in); we keep (in, out) directly)
    w1t = s * jax.random.normal(ks[0], (ITEM_INPUT_DIM, ITEM_HIDDIM), jnp.float32)
    b1 = s * jax.random.normal(ks[1], (1, ITEM_HIDDIM), jnp.float32)
    w2t = s * jax.random.normal(ks[2], (ITEM_HIDDIM, ITEM_HIDDIM), jnp.float32)
    b2 = s * jax.random.normal(ks[3], (1, ITEM_HIDDIM), jnp.float32)
    w3t = s * jax.random.normal(ks[4], (ITEM_HIDDIM, NUM_FACTORS), jnp.float32)
    b3 = s * jax.random.normal(ks[5], (1, NUM_FACTORS), jnp.float32)
    # LSTM: W_ih (4H, F) and W_hh (4H, H) in PyTorch; stored transposed here.
    wih_t = s * jax.random.normal(ks[6], (NUM_FACTORS, 4 * USER_HIDDIM), jnp.float32)
    whh_t = s * jax.random.normal(ks[7], (USER_HIDDIM, 4 * USER_HIDDIM), jnp.float32)
    b_ih = s * jax.random.normal(ks[8], (4 * USER_HIDDIM,), jnp.float32)
    b_hh = s * jax.random.normal(ks[9], (4 * USER_HIDDIM,), jnp.float32)
    lstm_b = (b_ih + b_hh).reshape(1, 4 * USER_HIDDIM)
    return {
        "mlp": (w1t, b1, w2t, b2, w3t, b3),
        "wih_t": wih_t,
        "whh_t": whh_t,
        "lstm_b": lstm_b,
    }


if __name__ == "__main__":
    key = jax.random.PRNGKey(0)
    k_par, k_u, k_i = jax.random.split(key, 3)

    params = init_params(k_par)
    packed = pack_params(params)          # one-time weight slab precompute

    user_item_inputs = jax.random.normal(k_u, (BATCH * SEQ, ITEM_INPUT_DIM), jnp.float32)
    item_inputs = jax.random.normal(k_i, (BATCH, ITEM_INPUT_DIM), jnp.float32)

    scores = content_recommender_forward(user_item_inputs, item_inputs, BATCH, packed)
    scores = jax.block_until_ready(scores)

    ref = reference_forward(user_item_inputs, item_inputs, BATCH, params)
    ref = jax.block_until_ready(ref)

    assert scores.shape == (BATCH,)
    np.testing.assert_allclose(np.asarray(scores), np.asarray(ref),
                               rtol=1e-5, atol=1e-5)
    print("KERNEL_OK")
</pallas_src>

<mosaic_0001>
module attributes {stable_mosaic.version = 11 : i64} {
  func.func @kernel(%arg0: memref<40x32xf32, #tpu.memory_space<vmem>>, %arg1: memref<152x64xf32, #tpu.memory_space<vmem>>, %arg2: memref<1x4xf32, #tpu.memory_space<vmem>>) attributes {dimension_semantics = [], scalar_prefetch = 0 : i64, scratch_operands = 0 : i64, tpu.core_type = #tpu.core_type<tc>} {
    %c0 = arith.constant 0 : index
    %c0_0 = arith.constant 0 : index
    %0 = vector.load %arg0[%c0, %c0_0] : memref<40x32xf32, #tpu.memory_space<vmem>>, vector<40x32xf32>
    %c0_1 = arith.constant 0 : index
    %c0_2 = arith.constant 0 : index
    %1 = vector.load %arg1[%c0_1, %c0_2] : memref<152x64xf32, #tpu.memory_space<vmem>>, vector<32x32xf32>
    %c32 = arith.constant 32 : index
    %c0_3 = arith.constant 0 : index
    %2 = vector.load %arg1[%c32, %c0_3] : memref<152x64xf32, #tpu.memory_space<vmem>>, vector<32x32xf32>
    %c64 = arith.constant 64 : index
    %c0_4 = arith.constant 0 : index
    %3 = vector.load %arg1[%c64, %c0_4] : memref<152x64xf32, #tpu.memory_space<vmem>>, vector<32x16xf32>
    %c96 = arith.constant 96 : index
    %c0_5 = arith.constant 0 : index
    %4 = vector.load %arg1[%c96, %c0_5] : memref<152x64xf32, #tpu.memory_space<vmem>>, vector<32x64xf32>
    %c128 = arith.constant 128 : index
    %c0_6 = arith.constant 0 : index
    %5 = vector.load %arg1[%c128, %c0_6] : memref<152x64xf32, #tpu.memory_space<vmem>>, vector<16x64xf32>
    %c144 = arith.constant 144 : index
    %c0_7 = arith.constant 0 : index
    %6 = vector.load %arg1[%c144, %c0_7] : memref<152x64xf32, #tpu.memory_space<vmem>>, vector<1x32xf32>
    %c145 = arith.constant 145 : index
    %c0_8 = arith.constant 0 : index
    %7 = vector.load %arg1[%c145, %c0_8] : memref<152x64xf32, #tpu.memory_space<vmem>>, vector<1x32xf32>
    %c146 = arith.constant 146 : index
    %c0_9 = arith.constant 0 : index
    %8 = vector.load %arg1[%c146, %c0_9] : memref<152x64xf32, #tpu.memory_space<vmem>>, vector<1x16xf32>
    %c147 = arith.constant 147 : index
    %c0_10 = arith.constant 0 : index
    %9 = vector.load %arg1[%c147, %c0_10] : memref<152x64xf32, #tpu.memory_space<vmem>>, vector<1x64xf32>
    %cst = arith.constant dense<0.000000e+00> : vector<40x32xf32>
    %10 = tpu.matmul %0, %1, %cst {dimension_numbers = #tpu.dot_dimension_numbers<[1], [0], [0], [1], [0, 0, 1, 1], [], []>} : vector<40x32xf32>, vector<32x32xf32>, vector<40x32xf32> -> vector<40x32xf32>
    %11 = vector.broadcast %6 : vector<1x32xf32> to vector<40x32xf32>
    %12 = arith.addf %10, %11 : vector<40x32xf32>
    %cst_11 = arith.constant 0.000000e+00 : f32
    %13 = vector.broadcast %cst_11 : f32 to vector<40x32xf32>
    %14 = arith.maximumf %12, %13 : vector<40x32xf32>
    %cst_12 = arith.constant dense<0.000000e+00> : vector<40x32xf32>
    %15 = tpu.matmul %14, %2, %cst_12 {dimension_numbers = #tpu.dot_dimension_numbers<[1], [0], [0], [1], [0, 0, 1, 1], [], []>} : vector<40x32xf32>, vector<32x32xf32>, vector<40x32xf32> -> vector<40x32xf32>
    %16 = vector.broadcast %7 : vector<1x32xf32> to vector<40x32xf32>
    %17 = arith.addf %15, %16 : vector<40x32xf32>
    %cst_13 = arith.constant 0.000000e+00 : f32
    %18 = vector.broadcast %cst_13 : f32 to vector<40x32xf32>
    %19 = arith.maximumf %17, %18 : vector<40x32xf32>
    %20 = vector.extract_strided_slice %19 {offsets = [0, 0], sizes = [32, 32], strides = [1, 1]} : vector<40x32xf32> to vector<32x32xf32>
    %21 = vector.extract_strided_slice %19 {offsets = [32, 0], sizes = [8, 32], strides = [1, 1]} : vector<40x32xf32> to vector<8x32xf32>
    %cst_14 = arith.constant dense<0.000000e+00> : vector<8x16xf32>
    %22 = tpu.matmul %21, %3, %cst_14 {dimension_numbers = #tpu.dot_dimension_numbers<[1], [0], [0], [1], [0, 0, 1, 1], [], []>} : vector<8x32xf32>, vector<32x16xf32>, vector<8x16xf32> -> vector<8x16xf32>
    %23 = vector.broadcast %8 : vector<1x16xf32> to vector<8x16xf32>
    %24 = arith.addf %22, %23 : vector<8x16xf32>
    %cst_15 = arith.constant dense<0.000000e+00> : vector<32x64xf32>
    %25 = tpu.matmul %20, %4, %cst_15 {dimension_numbers = #tpu.dot_dimension_numbers<[1], [0], [0], [1], [0, 0, 1, 1], [], []>} : vector<32x32xf32>, vector<32x64xf32>, vector<32x64xf32> -> vector<32x64xf32>
    %26 = vector.broadcast %9 : vector<1x64xf32> to vector<32x64xf32>
    %27 = arith.addf %25, %26 : vector<32x64xf32>
    %28 = tpu.iota {dimensions = array<i32: 1>} : vector<4x64xi32>
    %c32_i32 = arith.constant 32 : i32
    %29 = vector.broadcast %c32_i32 : i32 to vector<4x64xi32>
    %30 = arith.cmpi sge, %28, %29 : vector<4x64xi32>
    %c48_i32 = arith.constant 48 : i32
    %31 = vector.broadcast %c48_i32 : i32 to vector<4x64xi32>
    %32 = arith.cmpi slt, %28, %31 : vector<4x64xi32>
    %33 = arith.andi %30, %32 : vector<4x64xi1>
    %cst_16 = arith.constant 1.000000e+00 : f32
    %cst_17 = arith.constant 5.000000e-01 : f32
    %34 = vector.broadcast %cst_16 : f32 to vector<4x64xf32>
    %35 = vector.broadcast %cst_17 : f32 to vector<4x64xf32>
    %36 = arith.select %33, %34, %35 : vector<4x64xi1>, vector<4x64xf32>
    %cst_18 = arith.constant 0.000000e+00 : f32
    %cst_19 = arith.constant 5.000000e-01 : f32
    %37 = vector.broadcast %cst_18 : f32 to vector<4x64xf32>
    %38 = vector.broadcast %cst_19 : f32 to vector<4x64xf32>
    %39 = arith.select %33, %37, %38 : vector<4x64xi1>, vector<4x64xf32>
    %cst_20 = arith.constant 0.000000e+00 : f32
    %40 = vector.broadcast %cst_20 : f32 to vector<4x16xf32>
    %cst_21 = arith.constant 0.000000e+00 : f32
    %41 = vector.broadcast %cst_21 : f32 to vector<4x16xf32>
    %42 = vector.extract_strided_slice %27 {offsets = [0, 0], sizes = [4, 64], strides = [1, 1]} : vector<32x64xf32> to vector<4x64xf32>
    %cst_22 = arith.constant dense<0.000000e+00> : vector<4x64xf32>
    %43 = tpu.matmul %40, %5, %cst_22 {dimension_numbers = #tpu.dot_dimension_numbers<[1], [0], [0], [1], [0, 0, 1, 1], [], []>} : vector<4x16xf32>, vector<16x64xf32>, vector<4x64xf32> -> vector<4x64xf32>
    %44 = arith.addf %42, %43 : vector<4x64xf32>
    %45 = math.tanh %44 : vector<4x64xf32>
    %46 = arith.mulf %45, %36 : vector<4x64xf32>
    %47 = arith.addf %46, %39 : vector<4x64xf32>
    %48 = vector.extract_strided_slice %47 {offsets = [0, 0], sizes = [4, 16], strides = [1, 1]} : vector<4x64xf32> to vector<4x16xf32>
    %49 = vector.extract_strided_slice %47 {offsets = [0, 16], sizes = [4, 16], strides = [1, 1]} : vector<4x64xf32> to vector<4x16xf32>
    %50 = vector.extract_strided_slice %47 {offsets = [0, 32], sizes = [4, 16], strides = [1, 1]} : vector<4x64xf32> to vector<4x16xf32>
    %51 = vector.extract_strided_slice %47 {offsets = [0, 48], sizes = [4, 16], strides = [1, 1]} : vector<4x64xf32> to vector<4x16xf32>
    %52 = arith.mulf %49, %41 : vector<4x16xf32>
    %53 = arith.mulf %48, %50 : vector<4x16xf32>
    %54 = arith.addf %52, %53 : vector<4x16xf32>
    %55 = math.tanh %54 : vector<4x16xf32>
    %56 = arith.mulf %51, %55 : vector<4x16xf32>
    %57 = vector.extract_strided_slice %27 {offsets = [4, 0], sizes = [4, 64], strides = [1, 1]} : vector<32x64xf32> to vector<4x64xf32>
    %cst_23 = arith.constant dense<0.000000e+00> : vector<4x64xf32>
    %58 = tpu.matmul %56, %5, %cst_23 {dimension_numbers = #tpu.dot_dimension_numbers<[1], [0], [0], [1], [0, 0, 1, 1], [], []>} : vector<4x16xf32>, vector<16x64xf32>, vector<4x64xf32> -> vector<4x64xf32>
    %59 = arith.addf %57, %58 : vector<4x64xf32>
    %60 = math.tanh %59 : vector<4x64xf32>
    %61 = arith.mulf %60, %36 : vector<4x64xf32>
    %62 = arith.addf %61, %39 : vector<4x64xf32>
    %63 = vector.extract_strided_slice %62 {offsets = [0, 0], sizes = [4, 16], strides = [1, 1]} : vector<4x64xf32> to vector<4x16xf32>
    %64 = vector.extract_strided_slice %62 {offsets = [0, 16], sizes = [4, 16], strides = [1, 1]} : vector<4x64xf32> to vector<4x16xf32>
    %65 = vector.extract_strided_slice %62 {offsets = [0, 32], sizes = [4, 16], strides = [1, 1]} : vector<4x64xf32> to vector<4x16xf32>
    %66 = vector.extract_strided_slice %62 {offsets = [0, 48], sizes = [4, 16], strides = [1, 1]} : vector<4x64xf32> to vector<4x16xf32>
    %67 = arith.mulf %64, %54 : vector<4x16xf32>
    %68 = arith.mulf %63, %65 : vector<4x16xf32>
    %69 = arith.addf %67, %68 : vector<4x16xf32>
    %70 = math.tanh %69 : vector<4x16xf32>
    %71 = arith.mulf %66, %70 : vector<4x16xf32>
    %72 = vector.extract_strided_slice %27 {offsets = [8, 0], sizes = [4, 64], strides = [1, 1]} : vector<32x64xf32> to vector<4x64xf32>
    %cst_24 = arith.constant dense<0.000000e+00> : vector<4x64xf32>
    %73 = tpu.matmul %71, %5, %cst_24 {dimension_numbers = #tpu.dot_dimension_numbers<[1], [0], [0], [1], [0, 0, 1, 1], [], []>} : vector<4x16xf32>, vector<16x64xf32>, vector<4x64xf32> -> vector<4x64xf32>
    %74 = arith.addf %72, %73 : vector<4x64xf32>
    %75 = math.tanh %74 : vector<4x64xf32>
    %76 = arith.mulf %75, %36 : vector<4x64xf32>
    %77 = arith.addf %76, %39 : vector<4x64xf32>
    %78 = vector.extract_strided_slice %77 {offsets = [0, 0], sizes = [4, 16], strides = [1, 1]} : vector<4x64xf32> to vector<4x16xf32>
    %79 = vector.extract_strided_slice %77 {offsets = [0, 16], sizes = [4, 16], strides = [1, 1]} : vector<4x64xf32> to vector<4x16xf32>
    %80 = vector.extract_strided_slice %77 {offsets = [0, 32], sizes = [4, 16], strides = [1, 1]} : vector<4x64xf32> to vector<4x16xf32>
    %81 = vector.extract_strided_slice %77 {offsets = [0, 48], sizes = [4, 16], strides = [1, 1]} : vector<4x64xf32> to vector<4x16xf32>
    %82 = arith.mulf %79, %69 : vector<4x16xf32>
    %83 = arith.mulf %78, %80 : vector<4x16xf32>
    %84 = arith.addf %82, %83 : vector<4x16xf32>
    %85 = math.tanh %84 : vector<4x16xf32>
    %86 = arith.mulf %81, %85 : vector<4x16xf32>
    %87 = vector.extract_strided_slice %27 {offsets = [12, 0], sizes = [4, 64], strides = [1, 1]} : vector<32x64xf32> to vector<4x64xf32>
    %cst_25 = arith.constant dense<0.000000e+00> : vector<4x64xf32>
    %88 = tpu.matmul %86, %5, %cst_25 {dimension_numbers = #tpu.dot_dimension_numbers<[1], [0], [0], [1], [0, 0, 1, 1], [], []>} : vector<4x16xf32>, vector<16x64xf32>, vector<4x64xf32> -> vector<4x64xf32>
    %89 = arith.addf %87, %88 : vector<4x64xf32>
    %90 = math.tanh %89 : vector<4x64xf32>
    %91 = arith.mulf %90, %36 : vector<4x64xf32>
    %92 = arith.addf %91, %39 : vector<4x64xf32>
    %93 = vector.extract_strided_slice %92 {offsets = [0, 0], sizes = [4, 16], strides = [1, 1]} : vector<4x64xf32> to vector<4x16xf32>
    %94 = vector.extract_strided_slice %92 {offsets = [0, 16], sizes = [4, 16], strides = [1, 1]} : vector<4x64xf32> to vector<4x16xf32>
    %95 = vector.extract_strided_slice %92 {offsets = [0, 32], sizes = [4, 16], strides = [1, 1]} : vector<4x64xf32> to vector<4x16xf32>
    %96 = vector.extract_strided_slice %92 {offsets = [0, 48], sizes = [4, 16], strides = [1, 1]} : vector<4x64xf32> to vector<4x16xf32>
    %97 = arith.mulf %94, %84 : vector<4x16xf32>
    %98 = arith.mulf %93, %95 : vector<4x16xf32>
    %99 = arith.addf %97, %98 : vector<4x16xf32>
    %100 = math.tanh %99 : vector<4x16xf32>
    %101 = arith.mulf %96, %100 : vector<4x16xf32>
    %102 = vector.extract_strided_slice %27 {offsets = [16, 0], sizes = [4, 64], strides = [1, 1]} : vector<32x64xf32> to vector<4x64xf32>
    %cst_26 = arith.constant dense<0.000000e+00> : vector<4x64xf32>
    %103 = tpu.matmul %101, %5, %cst_26 {dimension_numbers = #tpu.dot_dimension_numbers<[1], [0], [0], [1], [0, 0, 1, 1], [], []>} : vector<4x16xf32>, vector<16x64xf32>, vector<4x64xf32> -> vector<4x64xf32>
    %104 = arith.addf %102, %103 : vector<4x64xf32>
    %105 = math.tanh %104 : vector<4x64xf32>
    %106 = arith.mulf %105, %36 : vector<4x64xf32>
    %107 = arith.addf %106, %39 : vector<4x64xf32>
    %108 = vector.extract_strided_slice %107 {offsets = [0, 0], sizes = [4, 16], strides = [1, 1]} : vector<4x64xf32> to vector<4x16xf32>
    %109 = vector.extract_strided_slice %107 {offsets = [0, 16], sizes = [4, 16], strides = [1, 1]} : vector<4x64xf32> to vector<4x16xf32>
    %110 = vector.extract_strided_slice %107 {offsets = [0, 32], sizes = [4, 16], strides = [1, 1]} : vector<4x64xf32> to vector<4x16xf32>
    %111 = vector.extract_strided_slice %107 {offsets = [0, 48], sizes = [4, 16], strides = [1, 1]} : vector<4x64xf32> to vector<4x16xf32>
    %112 = arith.mulf %109, %99 : vector<4x16xf32>
    %113 = arith.mulf %108, %110 : vector<4x16xf32>
    %114 = arith.addf %112, %113 : vector<4x16xf32>
    %115 = math.tanh %114 : vector<4x16xf32>
    %116 = arith.mulf %111, %115 : vector<4x16xf32>
    %117 = vector.extract_strided_slice %27 {offsets = [20, 0], sizes = [4, 64], strides = [1, 1]} : vector<32x64xf32> to vector<4x64xf32>
    %cst_27 = arith.constant dense<0.000000e+00> : vector<4x64xf32>
    %118 = tpu.matmul %116, %5, %cst_27 {dimension_numbers = #tpu.dot_dimension_numbers<[1], [0], [0], [1], [0, 0, 1, 1], [], []>} : vector<4x16xf32>, vector<16x64xf32>, vector<4x64xf32> -> vector<4x64xf32>
    %119 = arith.addf %117, %118 : vector<4x64xf32>
    %120 = math.tanh %119 : vector<4x64xf32>
    %121 = arith.mulf %120, %36 : vector<4x64xf32>
    %122 = arith.addf %121, %39 : vector<4x64xf32>
    %123 = vector.extract_strided_slice %122 {offsets = [0, 0], sizes = [4, 16], strides = [1, 1]} : vector<4x64xf32> to vector<4x16xf32>
    %124 = vector.extract_strided_slice %122 {offsets = [0, 16], sizes = [4, 16], strides = [1, 1]} : vector<4x64xf32> to vector<4x16xf32>
    %125 = vector.extract_strided_slice %122 {offsets = [0, 32], sizes = [4, 16], strides = [1, 1]} : vector<4x64xf32> to vector<4x16xf32>
    %126 = vector.extract_strided_slice %122 {offsets = [0, 48], sizes = [4, 16], strides = [1, 1]} : vector<4x64xf32> to vector<4x16xf32>
    %127 = arith.mulf %124, %114 : vector<4x16xf32>
    %128 = arith.mulf %123, %125 : vector<4x16xf32>
    %129 = arith.addf %127, %128 : vector<4x16xf32>
    %130 = math.tanh %129 : vector<4x16xf32>
    %131 = arith.mulf %126, %130 : vector<4x16xf32>
    %132 = vector.extract_strided_slice %27 {offsets = [24, 0], sizes = [4, 64], strides = [1, 1]} : vector<32x64xf32> to vector<4x64xf32>
    %cst_28 = arith.constant dense<0.000000e+00> : vector<4x64xf32>
    %133 = tpu.matmul %131, %5, %cst_28 {dimension_numbers = #tpu.dot_dimension_numbers<[1], [0], [0], [1], [0, 0, 1, 1], [], []>} : vector<4x16xf32>, vector<16x64xf32>, vector<4x64xf32> -> vector<4x64xf32>
    %134 = arith.addf %132, %133 : vector<4x64xf32>
    %135 = math.tanh %134 : vector<4x64xf32>
    %136 = arith.mulf %135, %36 : vector<4x64xf32>
    %137 = arith.addf %136, %39 : vector<4x64xf32>
    %138 = vector.extract_strided_slice %137 {offsets = [0, 0], sizes = [4, 16], strides = [1, 1]} : vector<4x64xf32> to vector<4x16xf32>
    %139 = vector.extract_strided_slice %137 {offsets = [0, 16], sizes = [4, 16], strides = [1, 1]} : vector<4x64xf32> to vector<4x16xf32>
    %140 = vector.extract_strided_slice %137 {offsets = [0, 32], sizes = [4, 16], strides = [1, 1]} : vector<4x64xf32> to vector<4x16xf32>
    %141 = vector.extract_strided_slice %137 {offsets = [0, 48], sizes = [4, 16], strides = [1, 1]} : vector<4x64xf32> to vector<4x16xf32>
    %142 = arith.mulf %139, %129 : vector<4x16xf32>
    %143 = arith.mulf %138, %140 : vector<4x16xf32>
    %144 = arith.addf %142, %143 : vector<4x16xf32>
    %145 = math.tanh %144 : vector<4x16xf32>
    %146 = arith.mulf %141, %145 : vector<4x16xf32>
    %147 = vector.extract_strided_slice %27 {offsets = [28, 0], sizes = [4, 64], strides = [1, 1]} : vector<32x64xf32> to vector<4x64xf32>
    %cst_29 = arith.constant dense<0.000000e+00> : vector<4x64xf32>
    %148 = tpu.matmul %146, %5, %cst_29 {dimension_numbers = #tpu.dot_dimension_numbers<[1], [0], [0], [1], [0, 0, 1, 1], [], []>} : vector<4x16xf32>, vector<16x64xf32>, vector<4x64xf32> -> vector<4x64xf32>
    %149 = arith.addf %147, %148 : vector<4x64xf32>
    %150 = math.tanh %149 : vector<4x64xf32>
    %151 = arith.mulf %150, %36 : vector<4x64xf32>
    %152 = arith.addf %151, %39 : vector<4x64xf32>
    %153 = vector.extract_strided_slice %152 {offsets = [0, 0], sizes = [4, 16], strides = [1, 1]} : vector<4x64xf32> to vector<4x16xf32>
    %154 = vector.extract_strided_slice %152 {offsets = [0, 16], sizes = [4, 16], strides = [1, 1]} : vector<4x64xf32> to vector<4x16xf32>
    %155 = vector.extract_strided_slice %152 {offsets = [0, 32], sizes = [4, 16], strides = [1, 1]} : vector<4x64xf32> to vector<4x16xf32>
    %156 = vector.extract_strided_slice %152 {offsets = [0, 48], sizes = [4, 16], strides = [1, 1]} : vector<4x64xf32> to vector<4x16xf32>
    %157 = arith.mulf %154, %144 : vector<4x16xf32>
    %158 = arith.mulf %153, %155 : vector<4x16xf32>
    %159 = arith.addf %157, %158 : vector<4x16xf32>
    %160 = math.tanh %159 : vector<4x16xf32>
    %161 = arith.mulf %156, %160 : vector<4x16xf32>
    %162 = vector.extract_strided_slice %24 {offsets = [0, 0], sizes = [4, 16], strides = [1, 1]} : vector<8x16xf32> to vector<4x16xf32>
    %163 = arith.mulf %161, %162 : vector<4x16xf32>
    %cst_30 = arith.constant dense<0.000000e+00> : vector<4xf32>
    %164 = vector.multi_reduction <add>, %163, %cst_30 [1] : vector<4x16xf32> to vector<4xf32>
    %165 = vector.shape_cast %164 : vector<4xf32> to vector<1x4xf32>
    %c0_31 = arith.constant 0 : index
    %c0_32 = arith.constant 0 : index
    %166 = vector.load %arg2[%c0_31, %c0_32] : memref<1x4xf32, #tpu.memory_space<vmem>>, vector<1x4xf32>
    tpu.vector_store %arg2[%c0_31, %c0_32], %165 {strides = array<i32>} : memref<1x4xf32, #tpu.memory_space<vmem>>, vector<1x4xf32>,
    return
  }
}

</mosaic_0001>

<llo_original>
// kernel: tpu_custom_call.1
$region0: #{tpu_custom_call.1}
  #allocation0 [shape = 'u32[]', space=smem, size = 0x4, offset = 0x4, fixed_abs, tag = 'smem constant byte address 0x4 - core index']
  #allocation1 [shape = 'u32[144,128]{1,0:T(1,128)}', space=vmem, size = 0x12000, scoped, tag = 'internal scratch']
  %s0 = inlined_call_operand.vmem [shape: f32[40,32], index: 0, kind: input, shape index: {}]
  %s1 = inlined_call_operand.vmem [shape: f32[152,64], index: 1, kind: input, shape index: {}]
  %s2 = inlined_call_operand.hbm [shape: f32[1,4], index: 2, kind: output, shape index: {}]
  %s3 = sld [smem:[#allocation0]]
  $region18: #{tpu_custom_call.1} parent=0
    _
  %s5 = ssub.s32 1, %s3
  %s6 = scalar_select 0, %s5, %s3
  $region1: #{tpu_custom_call.1} parent=0
    #allocation2 [shape = 'u8[512]{0}', space=vmem, size = 0x400, scoped, tag = 'output window, operand 0, single buffered']
    #allocation3 [shape = 's32[1]{0}', space=sflag, size = 0x4, scoped, tag = 'scoped memory for tpu_custom_call.1']
    %7 = vsyncpa [#allocation3], 0
    // Predicated region
    $region2: #{tpu_custom_call.1} parent=1 // pred_check
      _
    $region3: #{tpu_custom_call.1} parent=1 // pred_check_branch
      %9 = sbr.rel (0) target = $region5
    $region4: #{tpu_custom_call.1} parent=1 // pred_region
      _
    $region5: #{tpu_custom_call.1} parent=1 // pred_fallthru
      _
    // Predicated region
    $region6: #{tpu_custom_call.1} parent=1 // pred_check
      _
    $region7: #{tpu_custom_call.1} parent=1 // pred_check_branch
      %11 = sbr.rel (0) target = $region9
    $region8: #{tpu_custom_call.1} parent=1 // pred_region
      _
    $region9: #{tpu_custom_call.1} parent=1 // pred_fallthru
      _
    %v12 = vld [vmem:[%s0] sm:$0xff]
    %v13 = vld [vmem:[%s0 + $0x8] sm:$0xff]
    %v14 = vld [vmem:[%s0 + $0x10] sm:$0xff]
    %v15 = vld [vmem:[%s0 + $0x18] sm:$0xff]
    %v16 = vld [vmem:[%s0 + $0x20] sm:$0xff]
    %v17 = vld [vmem:[%s1] sm:$0xff]
    %v18 = vld [vmem:[%s1 + $0x8] sm:$0xff]
    %v19 = vld [vmem:[%s1 + $0x10] sm:$0xff]
    %v20 = vld [vmem:[%s1 + $0x18] sm:$0xff]
    %v21 = vld [vmem:[%s1 + $0x20] sm:$0xff]
    %v22 = vld [vmem:[%s1 + $0x28] sm:$0xff]
    %v23 = vld [vmem:[%s1 + $0x30] sm:$0xff]
    %v24 = vld [vmem:[%s1 + $0x38] sm:$0xff]
    %v25 = vld [vmem:[%s1 + $0x40] sm:$0xff]
    %v26 = vld [vmem:[%s1 + $0x48] sm:$0xff]
    %v27 = vld [vmem:[%s1 + $0x50] sm:$0xff]
    %v28 = vld [vmem:[%s1 + $0x58] sm:$0xff]
    %v29 = vld [vmem:[%s1 + $0x60] sm:$0xff]
    %v30 = vld [vmem:[%s1 + $0x68] sm:$0xff]
    %v31 = vld [vmem:[%s1 + $0x70] sm:$0xff]
    %v32 = vld [vmem:[%s1 + $0x78] sm:$0xff]
    %v33 = vld [vmem:[%s1 + $0x80] sm:$0xff]
    %v34 = vld [vmem:[%s1 + $0x88] sm:$0xff]
    %v35 = vld [vmem:[%s1 + $0x90] sm:$0x1]
    %v36 = vld [vmem:[%s1 + $0x91] sm:$0x1]
    %v37 = vld [vmem:[%s1 + $0x92] sm:$0x1]
    %v38 = vld [vmem:[%s1 + $0x93] sm:$0x1]
    %v39 = vlaneseq
    %v40 = vshrl.u32 %v39, 7
    %v41 = vsub.s32 0, %v40
    %v42 = vrot.slane %v35, %v41
    %vm43 = vcmask 261120
    %v45 = vsel %vm43, %v12, 0
    %v48 = vsel %vm43, %v13, 0
    %v51 = vsel %vm43, %v14, 0
    %v54 = vsel %vm43, %v15, 0
    %v57 = vsel %vm43, %v16, 0
    %59 = vmatprep.subr.mxu0 0.0
    %60 = vmatpush1.msra.mxu0 %v17
    %61 = vmatprep.subr.mxu0 0.0
    %62 = vmatpush1.msra.mxu0 %v18
    %63 = vmatprep.subr.mxu0 0.0
    %64 = vmatpush1.msra.mxu0 %v19
    %65 = vmatprep.subr.mxu0 0.0
    %66 = vmatpush1.msra.mxu0 %v20
    %67 = vmatprep.subr.mxu0 0.0
    %68 = vmatpush1.msra.mxu0 0.0
    %69 = vmatprep.subr.mxu0 0.0
    %70 = vmatpush1.msra.mxu0 0.0
    %71 = vmatprep.subr.mxu0 0.0
    %72 = vmatpush1.msra.mxu0 0.0
    %73 = vmatprep.subr.mxu0 0.0
    %74 = vmatpush1.msra.mxu0 0.0
    %75 = vmatprep.subr.mxu0 0.0
    %76 = vmatpush1.msra.mxu0 0.0
    %77 = vmatprep.subr.mxu0 0.0
    %78 = vmatpush1.msra.mxu0 0.0
    %79 = vmatprep.subr.mxu0 0.0
    %80 = vmatpush1.msra.mxu0 0.0
    %81 = vmatprep.subr.mxu0 0.0
    %82 = vmatpush1.msra.mxu0 0.0
    %83 = vmatprep.subr.mxu0 0.0
    %84 = vmatpush1.msra.mxu0 0.0
    %85 = vmatprep.subr.mxu0 0.0
    %86 = vmatpush1.msra.mxu0 0.0
    %87 = vmatprep.subr.mxu0 0.0
    %88 = vmatpush1.msra.mxu0 0.0
    %89 = vmatprep.subr.mxu0 0.0
    %90 = vmatpush1.msra.mxu0 0.0
    %91 = vmatprep.subr.mxu0 0.0
    %92 = vmatpush1.msra.mxu0 0.0
    %93 = vmatprep.subr.mxu0 0.0
    %94 = vmatpush1.msra.mxu0 0.0
    %95 = vmatprep.subr.mxu0 0.0
    %96 = vmatpush1.msra.mxu0 0.0
    %97 = vmatprep.subr.mxu0 0.0
    %98 = vmatpush1.msra.mxu0 0.0
    %99 = vmatprep.subr.mxu0 0.0
    %100 = vmatpush1.msra.mxu0 0.0
    %101 = vmatprep.subr.mxu0 0.0
    %102 = vmatpush1.msra.mxu0 0.0
    %103 = vmatprep.subr.mxu0 0.0
    %104 = vmatpush1.msra.mxu0 0.0
    %105 = vmatprep.subr.mxu0 0.0
    %106 = vmatpush1.msra.mxu0 0.0
    %107 = vmatprep.subr.mxu0 0.0
    %108 = vmatpush1.msra.mxu0 0.0
    %109 = vmatprep.subr.mxu0 0.0
    %110 = vmatpush1.msra.mxu0 0.0
    %111 = vmatprep.subr.mxu0 0.0
    %112 = vmatpush1.msra.mxu0 0.0
    %113 = vmatprep.subr.mxu0 0.0
    %114 = vmatpush1.msra.mxu0 0.0
    %115 = vmatprep.subr.mxu0 0.0
    %116 = vmatpush1.msra.mxu0 0.0
    %117 = vmatprep.subr.mxu0 0.0
    %118 = vmatpush1.msra.mxu0 0.0
    %119 = vmatprep.subr.mxu0 0.0
    %120 = vmatpush1.msra.mxu0 0.0
    %121 = vmatprep.subr.mxu0 0.0
    %122 = vmatpush1.msra.mxu0 0.0
    %123 = vmatprep.mubr.f32.mxu0 0.0
    %124 = vmatmul.mubr.f32.gmra.mrb[0].mxu0 %v45
    %v125 = vpop.f32.mrb[0].mxu0
    %v126 = vadd.f32 %v42, %v125
    %v127 = vpop.f32.mrb[0].mxu0
    %128 = vmatprep.mubr.f32.mxu0 0.0
    %129 = vmatmul.mubr.f32.gmra.mrb[0].mxu0 %v48
    %v130 = vpop.f32.mrb[0].mxu0
    %v131 = vadd.f32 %v42, %v130
    %v132 = vpop.f32.mrb[0].mxu0
    %133 = vmatprep.mubr.f32.mxu0 0.0
    %134 = vmatmul.mubr.f32.gmra.mrb[0].mxu0 %v51
    %v135 = vpop.f32.mrb[0].mxu0
    %v136 = vadd.f32 %v42, %v135
    %v137 = vpop.f32.mrb[0].mxu0
    %138 = vmatprep.mubr.f32.mxu0 0.0
    %139 = vmatmul.mubr.f32.gmra.mrb[0].mxu0 %v54
    %v140 = vpop.f32.mrb[0].mxu0
    %v141 = vadd.f32 %v42, %v140
    %v142 = vpop.f32.mrb[0].mxu0
    %143 = vmatprep.mubr.f32.mxu0 0.0
    %144 = vmatmul.mubr.f32.gmra.mrb[0].mxu0 %v57
    %v145 = vpop.f32.mrb[0].mxu0
    %v146 = vadd.f32 %v42, %v145
    %v147 = vpop.f32.mrb[0].mxu0
    %148 = vdwg.mxu0
    %v149 = vmax.f32 %v126, 0.0
    %v150 = vmax.f32 %v131, 0.0
    %v151 = vmax.f32 %v136, 0.0
    %v152 = vmax.f32 %v141, 0.0
    %v153 = vmax.f32 %v146, 0.0
    %v154 = vlaneseq
    %v155 = vshrl.u32 %v154, 7
    %v156 = vsub.s32 0, %v155
    %v157 = vrot.slane %v36, %v156
    %v159 = vsel %vm43, %v149, 0
    %v162 = vsel %vm43, %v150, 0
    %v165 = vsel %vm43, %v151, 0
    %v168 = vsel %vm43, %v152, 0
    %v171 = vsel %vm43, %v153, 0
    %173 = vmatprep.subr.mxu0 0.0
    %174 = vmatpush1.msra.mxu0 %v21
    %175 = vmatprep.subr.mxu0 0.0
    %176 = vmatpush1.msra.mxu0 %v22
    %177 = vmatprep.subr.mxu0 0.0
    %178 = vmatpush1.msra.mxu0 %v23
    %179 = vmatprep.subr.mxu0 0.0
    %180 = vmatpush1.msra.mxu0 %v24
    %181 = vmatprep.subr.mxu0 0.0
    %182 = vmatpush1.msra.mxu0 0.0
    %183 = vmatprep.subr.mxu0 0.0
    %184 = vmatpush1.msra.mxu0 0.0
    %185 = vmatprep.subr.mxu0 0.0
    %186 = vmatpush1.msra.mxu0 0.0
    %187 = vmatprep.subr.mxu0 0.0
    %188 = vmatpush1.msra.mxu0 0.0
    %189 = vmatprep.subr.mxu0 0.0
    %190 = vmatpush1.msra.mxu0 0.0
    %191 = vmatprep.subr.mxu0 0.0
    %192 = vmatpush1.msra.mxu0 0.0
    %193 = vmatprep.subr.mxu0 0.0
    %194 = vmatpush1.msra.mxu0 0.0
    %195 = vmatprep.subr.mxu0 0.0
    %196 = vmatpush1.msra.mxu0 0.0
    %197 = vmatprep.subr.mxu0 0.0
    %198 = vmatpush1.msra.mxu0 0.0
    %199 = vmatprep.subr.mxu0 0.0
    %200 = vmatpush1.msra.mxu0 0.0
    %201 = vmatprep.subr.mxu0 0.0
    %202 = vmatpush1.msra.mxu0 0.0
    %203 = vmatprep.subr.mxu0 0.0
    %204 = vmatpush1.msra.mxu0 0.0
    %205 = vmatprep.subr.mxu0 0.0
    %206 = vmatpush1.msra.mxu0 0.0
    %207 = vmatprep.subr.mxu0 0.0
    %208 = vmatpush1.msra.mxu0 0.0
    %209 = vmatprep.subr.mxu0 0.0
    %210 = vmatpush1.msra.mxu0 0.0
    %211 = vmatprep.subr.mxu0 0.0
    %212 = vmatpush1.msra.mxu0 0.0
    %213 = vmatprep.subr.mxu0 0.0
    %214 = vmatpush1.msra.mxu0 0.0
    %215 = vmatprep.subr.mxu0 0.0
    %216 = vmatpush1.msra.mxu0 0.0
    %217 = vmatprep.subr.mxu0 0.0
    %218 = vmatpush1.msra.mxu0 0.0
    %219 = vmatprep.subr.mxu0 0.0
    %220 = vmatpush1.msra.mxu0 0.0
    %221 = vmatprep.subr.mxu0 0.0
    %222 = vmatpush1.msra.mxu0 0.0
    %223 = vmatprep.subr.mxu0 0.0
    %224 = vmatpush1.msra.mxu0 0.0
    %225 = vmatprep.subr.mxu0 0.0
    %226 = vmatpush1.msra.mxu0 0.0
    %227 = vmatprep.subr.mxu0 0.0
    %228 = vmatpush1.msra.mxu0 0.0
    %229 = vmatprep.subr.mxu0 0.0
    %230 = vmatpush1.msra.mxu0 0.0
    %231 = vmatprep.subr.mxu0 0.0
    %232 = vmatpush1.msra.mxu0 0.0
    %233 = vmatprep.subr.mxu0 0.0
    %234 = vmatpush1.msra.mxu0 0.0
    %235 = vmatprep.subr.mxu0 0.0
    %236 = vmatpush1.msra.mxu0 0.0
    %237 = vmatprep.mubr.f32.mxu0 0.0
    %238 = vmatmul.mubr.f32.gmra.mrb[0].mxu0 %v159
    %v239 = vpop.f32.mrb[0].mxu0
    %v240 = vadd.f32 %v157, %v239
    %v241 = vpop.f32.mrb[0].mxu0
    %242 = vmatprep.mubr.f32.mxu0 0.0
    %243 = vmatmul.mubr.f32.gmra.mrb[0].mxu0 %v162
    %v244 = vpop.f32.mrb[0].mxu0
    %v245 = vadd.f32 %v157, %v244
    %v246 = vpop.f32.mrb[0].mxu0
    %247 = vmatprep.mubr.f32.mxu0 0.0
    %248 = vmatmul.mubr.f32.gmra.mrb[0].mxu0 %v165
    %v249 = vpop.f32.mrb[0].mxu0
    %v250 = vadd.f32 %v157, %v249
    %v251 = vpop.f32.mrb[0].mxu0
    %252 = vmatprep.mubr.f32.mxu0 0.0
    %253 = vmatmul.mubr.f32.gmra.mrb[0].mxu0 %v168
    %v254 = vpop.f32.mrb[0].mxu0
    %v255 = vadd.f32 %v157, %v254
    %v256 = vpop.f32.mrb[0].mxu0
    %257 = vmatprep.mubr.f32.mxu0 0.0
    %258 = vmatmul.mubr.f32.gmra.mrb[0].mxu0 %v171
    %v259 = vpop.f32.mrb[0].mxu0
    %v260 = vadd.f32 %v157, %v259
    %v261 = vpop.f32.mrb[0].mxu0
    %262 = vdwg.mxu0
    %v263 = vmax.f32 %v240, 0.0
    %v264 = vmax.f32 %v245, 0.0
    %v265 = vmax.f32 %v250, 0.0
    %v266 = vmax.f32 %v255, 0.0
    %v267 = vmax.f32 %v260, 0.0
    %v268 = vlaneseq
    %v269 = vshrl.u32 %v268, 7
    %v270 = vsub.s32 0, %v269
    %v271 = vrot.slane %v37, %v270
    %v273 = vsel %vm43, %v267, 0
    %275 = vmatprep.subr.mxu0 0.0
    %276 = vmatpush1.msra.mxu0 %v25
    %277 = vmatprep.subr.mxu0 0.0
    %278 = vmatpush1.msra.mxu0 %v26
    %279 = vmatprep.subr.mxu0 0.0
    %280 = vmatpush1.msra.mxu0 %v27
    %281 = vmatprep.subr.mxu0 0.0
    %282 = vmatpush1.msra.mxu0 %v28
    %283 = vmatprep.subr.mxu0 0.0
    %284 = vmatpush1.msra.mxu0 0.0
    %285 = vmatprep.subr.mxu0 0.0
    %286 = vmatpush1.msra.mxu0 0.0
    %287 = vmatprep.subr.mxu0 0.0
    %288 = vmatpush1.msra.mxu0 0.0
    %289 = vmatprep.subr.mxu0 0.0
    %290 = vmatpush1.msra.mxu0 0.0
    %291 = vmatprep.subr.mxu0 0.0
    %292 = vmatpush1.msra.mxu0 0.0
    %293 = vmatprep.subr.mxu0 0.0
    %294 = vmatpush1.msra.mxu0 0.0
    %295 = vmatprep.subr.mxu0 0.0
    %296 = vmatpush1.msra.mxu0 0.0
    %297 = vmatprep.subr.mxu0 0.0
    %298 = vmatpush1.msra.mxu0 0.0
    %299 = vmatprep.subr.mxu0 0.0
    %300 = vmatpush1.msra.mxu0 0.0
    %301 = vmatprep.subr.mxu0 0.0
    %302 = vmatpush1.msra.mxu0 0.0
    %303 = vmatprep.subr.mxu0 0.0
    %304 = vmatpush1.msra.mxu0 0.0
    %305 = vmatprep.subr.mxu0 0.0
    %306 = vmatpush1.msra.mxu0 0.0
    %307 = vmatprep.subr.mxu0 0.0
    %308 = vmatpush1.msra.mxu0 0.0
    %309 = vmatprep.subr.mxu0 0.0
    %310 = vmatpush1.msra.mxu0 0.0
    %311 = vmatprep.subr.mxu0 0.0
    %312 = vmatpush1.msra.mxu0 0.0
    %313 = vmatprep.subr.mxu0 0.0
    %314 = vmatpush1.msra.mxu0 0.0
    %315 = vmatprep.subr.mxu0 0.0
    %316 = vmatpush1.msra.mxu0 0.0
    %317 = vmatprep.subr.mxu0 0.0
    %318 = vmatpush1.msra.mxu0 0.0
    %319 = vmatprep.subr.mxu0 0.0
    %320 = vmatpush1.msra.mxu0 0.0
    %321 = vmatprep.subr.mxu0 0.0
    %322 = vmatpush1.msra.mxu0 0.0
    %323 = vmatprep.subr.mxu0 0.0
    %324 = vmatpush1.msra.mxu0 0.0
    %325 = vmatprep.subr.mxu0 0.0
    %326 = vmatpush1.msra.mxu0 0.0
    %327 = vmatprep.subr.mxu0 0.0
    %328 = vmatpush1.msra.mxu0 0.0
    %329 = vmatprep.subr.mxu0 0.0
    %330 = vmatpush1.msra.mxu0 0.0
    %331 = vmatprep.subr.mxu0 0.0
    %332 = vmatpush1.msra.mxu0 0.0
    %333 = vmatprep.subr.mxu0 0.0
    %334 = vmatpush1.msra.mxu0 0.0
    %335 = vmatprep.subr.mxu0 0.0
    %336 = vmatpush1.msra.mxu0 0.0
    %337 = vmatprep.subr.mxu0 0.0
    %338 = vmatpush1.msra.mxu0 0.0
    %339 = vmatprep.mubr.f32.mxu0 0.0
    %340 = vmatmul.mubr.f32.gmra.mrb[0].mxu0 %v273
    %v341 = vpop.f32.mrb[0].mxu0
    %v342 = vadd.f32 %v271, %v341
    %v343 = vpop.f32.mrb[0].mxu0
    %344 = vdwg.mxu0
    %v345 = vlaneseq
    %v346 = vshrl.u32 %v345, 7
    %v347 = vsub.s32 0, %v346
    %v348 = vrot.slane %v38, %v347
    %v350 = vsel %vm43, %v263, 0
    %v353 = vsel %vm43, %v264, 0
    %v356 = vsel %vm43, %v265, 0
    %v359 = vsel %vm43, %v266, 0
    %361 = vmatprep.subr.mxu0 0.0
    %362 = vmatpush1.msra.mxu0 %v29
    %363 = vmatprep.subr.mxu0 0.0
    %364 = vmatpush1.msra.mxu0 %v30
    %365 = vmatprep.subr.mxu0 0.0
    %366 = vmatpush1.msra.mxu0 %v31
    %367 = vmatprep.subr.mxu0 0.0
    %368 = vmatpush1.msra.mxu0 %v32
    %369 = vmatprep.subr.mxu0 0.0
    %370 = vmatpush1.msra.mxu0 0.0
    %371 = vmatprep.subr.mxu0 0.0
    %372 = vmatpush1.msra.mxu0 0.0
    %373 = vmatprep.subr.mxu0 0.0
    %374 = vmatpush1.msra.mxu0 0.0
    %375 = vmatprep.subr.mxu0 0.0
    %376 = vmatpush1.msra.mxu0 0.0
    %377 = vmatprep.subr.mxu0 0.0
    %378 = vmatpush1.msra.mxu0 0.0
    %379 = vmatprep.subr.mxu0 0.0
    %380 = vmatpush1.msra.mxu0 0.0
    %381 = vmatprep.subr.mxu0 0.0
    %382 = vmatpush1.msra.mxu0 0.0
    %383 = vmatprep.subr.mxu0 0.0
    %384 = vmatpush1.msra.mxu0 0.0
    %385 = vmatprep.subr.mxu0 0.0
    %386 = vmatpush1.msra.mxu0 0.0
    %387 = vmatprep.subr.mxu0 0.0
    %388 = vmatpush1.msra.mxu0 0.0
    %389 = vmatprep.subr.mxu0 0.0
    %390 = vmatpush1.msra.mxu0 0.0
    %391 = vmatprep.subr.mxu0 0.0
    %392 = vmatpush1.msra.mxu0 0.0
    %393 = vmatprep.subr.mxu0 0.0
    %394 = vmatpush1.msra.mxu0 0.0
    %395 = vmatprep.subr.mxu0 0.0
    %396 = vmatpush1.msra.mxu0 0.0
    %397 = vmatprep.subr.mxu0 0.0
    %398 = vmatpush1.msra.mxu0 0.0
    %399 = vmatprep.subr.mxu0 0.0
    %400 = vmatpush1.msra.mxu0 0.0
    %401 = vmatprep.subr.mxu0 0.0
    %402 = vmatpush1.msra.mxu0 0.0
    %403 = vmatprep.subr.mxu0 0.0
    %404 = vmatpush1.msra.mxu0 0.0
    %405 = vmatprep.subr.mxu0 0.0
    %406 = vmatpush1.msra.mxu0 0.0
    %407 = vmatprep.subr.mxu0 0.0
    %408 = vmatpush1.msra.mxu0 0.0
    %409 = vmatprep.subr.mxu0 0.0
    %410 = vmatpush1.msra.mxu0 0.0
    %411 = vmatprep.subr.mxu0 0.0
    %412 = vmatpush1.msra.mxu0 0.0
    %413 = vmatprep.subr.mxu0 0.0
    %414 = vmatpush1.msra.mxu0 0.0
    %415 = vmatprep.subr.mxu0 0.0
    %416 = vmatpush1.msra.mxu0 0.0
    %417 = vmatprep.subr.mxu0 0.0
    %418 = vmatpush1.msra.mxu0 0.0
    %419 = vmatprep.subr.mxu0 0.0
    %420 = vmatpush1.msra.mxu0 0.0
    %421 = vmatprep.subr.mxu0 0.0
    %422 = vmatpush1.msra.mxu0 0.0
    %423 = vmatprep.subr.mxu0 0.0
    %424 = vmatpush1.msra.mxu0 0.0
    %425 = vmatprep.mubr.f32.mxu0 0.0
    %426 = vmatmul.mubr.f32.gmra.mrb[0].mxu0 %v350
    %v427 = vpop.f32.mrb[0].mxu0
    %v428 = vadd.f32 %v348, %v427
    %v429 = vpop.f32.mrb[0].mxu0
    %430 = vmatprep.mubr.f32.mxu0 0.0
    %431 = vmatmul.mubr.f32.gmra.mrb[0].mxu0 %v353
    %v432 = vpop.f32.mrb[0].mxu0
    %v433 = vadd.f32 %v348, %v432
    %v434 = vpop.f32.mrb[0].mxu0
    %435 = vmatprep.mubr.f32.mxu0 0.0
    %436 = vmatmul.mubr.f32.gmra.mrb[0].mxu0 %v356
    %v437 = vpop.f32.mrb[0].mxu0
    %v438 = vadd.f32 %v348, %v437
    %v439 = vpop.f32.mrb[0].mxu0
    %440 = vmatprep.mubr.f32.mxu0 0.0
    %441 = vmatmul.mubr.f32.gmra.mrb[0].mxu0 %v359
    %v442 = vpop.f32.mrb[0].mxu0
    %v443 = vadd.f32 %v348, %v442
    %v444 = vpop.f32.mrb[0].mxu0
    %445 = vdwg.mxu0
    %v446 = vlaneseq
    %v447 = vand.u32 %v446, 127
    %vm448 = vcmp.ge.s32.totalorder %v447, 32
    %vm449 = vcmp.lt.s32.totalorder %v447, 48
    %vm450 = vmand %vm448, %vm449
    %v451 = vsel %vm450, 1.0, 0.5
    %v452 = vsel %vm450, 0.0, 0.5
    %vm453 = vcmask 130048
    %v455 = vsel %vm453, 0.0, 0
    %457 = vmatprep.subr.mxu0 0.0
    %458 = vmatpush1.msra.mxu0 %v33
    %459 = vmatprep.subr.mxu0 0.0
    %460 = vmatpush1.msra.mxu0 %v34
    %461 = vmatprep.subr.mxu0 0.0
    %462 = vmatpush1.msra.mxu0 0.0
    %463 = vmatprep.subr.mxu0 0.0
    %464 = vmatpush1.msra.mxu0 0.0
    %465 = vmatprep.subr.mxu0 0.0
    %466 = vmatpush1.msra.mxu0 0.0
    %467 = vmatprep.subr.mxu0 0.0
    %468 = vmatpush1.msra.mxu0 0.0
    %469 = vmatprep.subr.mxu0 0.0
    %470 = vmatpush1.msra.mxu0 0.0
    %471 = vmatprep.subr.mxu0 0.0
    %472 = vmatpush1.msra.mxu0 0.0
    %473 = vmatprep.subr.mxu0 0.0
    %474 = vmatpush1.msra.mxu0 0.0
    %475 = vmatprep.subr.mxu0 0.0
    %476 = vmatpush1.msra.mxu0 0.0
    %477 = vmatprep.subr.mxu0 0.0
    %478 = vmatpush1.msra.mxu0 0.0
    %479 = vmatprep.subr.mxu0 0.0
    %480 = vmatpush1.msra.mxu0 0.0
    %481 = vmatprep.subr.mxu0 0.0
    %482 = vmatpush1.msra.mxu0 0.0
    %483 = vmatprep.subr.mxu0 0.0
    %484 = vmatpush1.msra.mxu0 0.0
    %485 = vmatprep.subr.mxu0 0.0
    %486 = vmatpush1.msra.mxu0 0.0
    %487 = vmatprep.subr.mxu0 0.0
    %488 = vmatpush1.msra.mxu0 0.0
    %489 = vmatprep.subr.mxu0 0.0
    %490 = vmatpush1.msra.mxu0 0.0
    %491 = vmatprep.subr.mxu0 0.0
    %492 = vmatpush1.msra.mxu0 0.0
    %493 = vmatprep.subr.mxu0 0.0
    %494 = vmatpush1.msra.mxu0 0.0
    %495 = vmatprep.subr.mxu0 0.0
    %496 = vmatpush1.msra.mxu0 0.0
    %497 = vmatprep.subr.mxu0 0.0
    %498 = vmatpush1.msra.mxu0 0.0
    %499 = vmatprep.subr.mxu0 0.0
    %500 = vmatpush1.msra.mxu0 0.0
    %501 = vmatprep.subr.mxu0 0.0
    %502 = vmatpush1.msra.mxu0 0.0
    %503 = vmatprep.subr.mxu0 0.0
    %504 = vmatpush1.msra.mxu0 0.0
    %505 = vmatprep.subr.mxu0 0.0
    %506 = vmatpush1.msra.mxu0 0.0
    %507 = vmatprep.subr.mxu0 0.0
    %508 = vmatpush1.msra.mxu0 0.0
    %509 = vmatprep.subr.mxu0 0.0
    %510 = vmatpush1.msra.mxu0 0.0
    %511 = vmatprep.subr.mxu0 0.0
    %512 = vmatpush1.msra.mxu0 0.0
    %513 = vmatprep.subr.mxu0 0.0
    %514 = vmatpush1.msra.mxu0 0.0
    %515 = vmatprep.subr.mxu0 0.0
    %516 = vmatpush1.msra.mxu0 0.0
    %517 = vmatprep.subr.mxu0 0.0
    %518 = vmatpush1.msra.mxu0 0.0
    %519 = vmatprep.subr.mxu0 0.0
    %520 = vmatpush1.msra.mxu0 0.0
    %521 = vmatprep.mubr.f32.mxu0 0.0
    %522 = vmatmul.mubr.f32.gmra.mrb[0].mxu0 %v455
    %v523 = vpop.f32.mrb[0].mxu0
    %v524 = vadd.f32 0.0, %v523
    %v525 = vpop.f32.mrb[0].mxu0
    %526 = vdwg.mxu0
    %v527 = vadd.f32 %v428, %v524
    %v528 = vtanh.pop %v527
    %v529 = vmul.f32 %v528, %v451
    %v530 = vadd.f32 %v529, %v452
    %v531 = vmul.f32 %v530, 0.0
    %533 = vrot.lane.b32.xlu0 %v530, 96
    %v534 = vpop.permute.xlu0 %533
    %v536 = vmul.f32 %v530, %v534
    %538 = vrot.lane.b32.xlu0 %v536, 16
    %v539 = vpop.permute.xlu0 %538
    %v541 = vadd.f32 %v531, %v539
    %v542 = vtanh.pop %v541
    %544 = vrot.lane.b32.xlu0 %v542, 32
    %v545 = vpop.permute.xlu0 %544
    %v547 = vmul.f32 %v530, %v545
    %549 = vrot.lane.b32.xlu0 %v547, 80
    %v550 = vpop.permute.xlu0 %549
    %v551 = vsel %vm453, %v550, 0
    %553 = vmatprep.subr.mxu0 0.0
    %554 = vmatpush1.msra.mxu0 %v33
    %555 = vmatprep.subr.mxu0 0.0
    %556 = vmatpush1.msra.mxu0 %v34
    %557 = vmatprep.subr.mxu0 0.0
    %558 = vmatpush1.msra.mxu0 0.0
    %559 = vmatprep.subr.mxu0 0.0
    %560 = vmatpush1.msra.mxu0 0.0
    %561 = vmatprep.subr.mxu0 0.0
    %562 = vmatpush1.msra.mxu0 0.0
    %563 = vmatprep.subr.mxu0 0.0
    %564 = vmatpush1.msra.mxu0 0.0
    %565 = vmatprep.subr.mxu0 0.0
    %566 = vmatpush1.msra.mxu0 0.0
    %567 = vmatprep.subr.mxu0 0.0
    %568 = vmatpush1.msra.mxu0 0.0
    %569 = vmatprep.subr.mxu0 0.0
    %570 = vmatpush1.msra.mxu0 0.0
    %571 = vmatprep.subr.mxu0 0.0
    %572 = vmatpush1.msra.mxu0 0.0
    %573 = vmatprep.subr.mxu0 0.0
    %574 = vmatpush1.msra.mxu0 0.0
    %575 = vmatprep.subr.mxu0 0.0
    %576 = vmatpush1.msra.mxu0 0.0
    %577 = vmatprep.subr.mxu0 0.0
    %578 = vmatpush1.msra.mxu0 0.0
    %579 = vmatprep.subr.mxu0 0.0
    %580 = vmatpush1.msra.mxu0 0.0
    %581 = vmatprep.subr.mxu0 0.0
    %582 = vmatpush1.msra.mxu0 0.0
    %583 = vmatprep.subr.mxu0 0.0
    %584 = vmatpush1.msra.mxu0 0.0
    %585 = vmatprep.subr.mxu0 0.0
    %586 = vmatpush1.msra.mxu0 0.0
    %587 = vmatprep.subr.mxu0 0.0
    %588 = vmatpush1.msra.mxu0 0.0
    %589 = vmatprep.subr.mxu0 0.0
    %590 = vmatpush1.msra.mxu0 0.0
    %591 = vmatprep.subr.mxu0 0.0
    %592 = vmatpush1.msra.mxu0 0.0
    %593 = vmatprep.subr.mxu0 0.0
    %594 = vmatpush1.msra.mxu0 0.0
    %595 = vmatprep.subr.mxu0 0.0
    %596 = vmatpush1.msra.mxu0 0.0
    %597 = vmatprep.subr.mxu0 0.0
    %598 = vmatpush1.msra.mxu0 0.0
    %599 = vmatprep.subr.mxu0 0.0
    %600 = vmatpush1.msra.mxu0 0.0
    %601 = vmatprep.subr.mxu0 0.0
    %602 = vmatpush1.msra.mxu0 0.0
    %603 = vmatprep.subr.mxu0 0.0
    %604 = vmatpush1.msra.mxu0 0.0
    %605 = vmatprep.subr.mxu0 0.0
    %606 = vmatpush1.msra.mxu0 0.0
    %607 = vmatprep.subr.mxu0 0.0
    %608 = vmatpush1.msra.mxu0 0.0
    %609 = vmatprep.subr.mxu0 0.0
    %610 = vmatpush1.msra.mxu0 0.0
    %611 = vmatprep.subr.mxu0 0.0
    %612 = vmatpush1.msra.mxu0 0.0
    %613 = vmatprep.subr.mxu0 0.0
    %614 = vmatpush1.msra.mxu0 0.0
    %615 = vmatprep.subr.mxu0 0.0
    %616 = vmatpush1.msra.mxu0 0.0
    %617 = vmatprep.mubr.f32.mxu0 0.0
    %618 = vmatmul.mubr.f32.gmra.mrb[0].mxu0 %v551
    %v619 = vpop.f32.mrb[0].mxu0
    %v620 = vadd.f32 0.0, %v619
    %v621 = vpop.f32.mrb[0].mxu0
    %622 = vdwg.mxu0
    %v624 = vrot.slane %v620, 4
    %v626 = vadd.f32 %v428, %v624
    %v627 = vtanh.pop %v626
    %v628 = vmul.f32 %v627, %v451
    %v629 = vadd.f32 %v628, %v452
    %v631 = vrot.slane %v541, 4
    %v633 = vmul.f32 %v629, %v631
    %635 = vrot.lane.b32.xlu0 %v629, 96
    %v636 = vpop.permute.xlu0 %635
    %v638 = vmul.f32 %v629, %v636
    %640 = vrot.lane.b32.xlu0 %v638, 16
    %v641 = vpop.permute.xlu0 %640
    %v643 = vadd.f32 %v633, %v641
    %v644 = vtanh.pop %v643
    %646 = vrot.lane.b32.xlu0 %v644, 32
    %v647 = vpop.permute.xlu0 %646
    %v649 = vmul.f32 %v629, %v647
    %v651 = vrot.slane %v649, 4
    %652 = vrot.lane.b32.xlu0 %v651, 80
    %v653 = vpop.permute.xlu0 %652
    %v654 = vsel %vm453, %v653, 0
    %656 = vmatprep.subr.mxu0 0.0
    %657 = vmatpush1.msra.mxu0 %v33
    %658 = vmatprep.subr.mxu0 0.0
    %659 = vmatpush1.msra.mxu0 %v34
    %660 = vmatprep.subr.mxu0 0.0
    %661 = vmatpush1.msra.mxu0 0.0
    %662 = vmatprep.subr.mxu0 0.0
    %663 = vmatpush1.msra.mxu0 0.0
    %664 = vmatprep.subr.mxu0 0.0
    %665 = vmatpush1.msra.mxu0 0.0
    %666 = vmatprep.subr.mxu0 0.0
    %667 = vmatpush1.msra.mxu0 0.0
    %668 = vmatprep.subr.mxu0 0.0
    %669 = vmatpush1.msra.mxu0 0.0
    %670 = vmatprep.subr.mxu0 0.0
    %671 = vmatpush1.msra.mxu0 0.0
    %672 = vmatprep.subr.mxu0 0.0
    %673 = vmatpush1.msra.mxu0 0.0
    %674 = vmatprep.subr.mxu0 0.0
    %675 = vmatpush1.msra.mxu0 0.0
    %676 = vmatprep.subr.mxu0 0.0
    %677 = vmatpush1.msra.mxu0 0.0
    %678 = vmatprep.subr.mxu0 0.0
    %679 = vmatpush1.msra.mxu0 0.0
    %680 = vmatprep.subr.mxu0 0.0
    %681 = vmatpush1.msra.mxu0 0.0
    %682 = vmatprep.subr.mxu0 0.0
    %683 = vmatpush1.msra.mxu0 0.0
    %684 = vmatprep.subr.mxu0 0.0
    %685 = vmatpush1.msra.mxu0 0.0
    %686 = vmatprep.subr.mxu0 0.0
    %687 = vmatpush1.msra.mxu0 0.0
    %688 = vmatprep.subr.mxu0 0.0
    %689 = vmatpush1.msra.mxu0 0.0
    %690 = vmatprep.subr.mxu0 0.0
    %691 = vmatpush1.msra.mxu0 0.0
    %692 = vmatprep.subr.mxu0 0.0
    %693 = vmatpush1.msra.mxu0 0.0
    %694 = vmatprep.subr.mxu0 0.0
    %695 = vmatpush1.msra.mxu0 0.0
    %696 = vmatprep.subr.mxu0 0.0
    %697 = vmatpush1.msra.mxu0 0.0
    %698 = vmatprep.subr.mxu0 0.0
    %699 = vmatpush1.msra.mxu0 0.0
    %700 = vmatprep.subr.mxu0 0.0
    %701 = vmatpush1.msra.mxu0 0.0
    %702 = vmatprep.subr.mxu0 0.0
    %703 = vmatpush1.msra.mxu0 0.0
    %704 = vmatprep.subr.mxu0 0.0
    %705 = vmatpush1.msra.mxu0 0.0
    %706 = vmatprep.subr.mxu0 0.0
    %707 = vmatpush1.msra.mxu0 0.0
    %708 = vmatprep.subr.mxu0 0.0
    %709 = vmatpush1.msra.mxu0 0.0
    %710 = vmatprep.subr.mxu0 0.0
    %711 = vmatpush1.msra.mxu0 0.0
    %712 = vmatprep.subr.mxu0 0.0
    %713 = vmatpush1.msra.mxu0 0.0
    %714 = vmatprep.subr.mxu0 0.0
    %715 = vmatpush1.msra.mxu0 0.0
    %716 = vmatprep.subr.mxu0 0.0
    %717 = vmatpush1.msra.mxu0 0.0
    %718 = vmatprep.subr.mxu0 0.0
    %719 = vmatpush1.msra.mxu0 0.0
    %720 = vmatprep.mubr.f32.mxu0 0.0
    %721 = vmatmul.mubr.f32.gmra.mrb[0].mxu0 %v654
    %v722 = vpop.f32.mrb[0].mxu0
    %v723 = vadd.f32 0.0, %v722
    %v724 = vpop.f32.mrb[0].mxu0
    %725 = vdwg.mxu0
    %v726 = vadd.f32 %v433, %v723
    %v727 = vtanh.pop %v726
    %v728 = vmul.f32 %v727, %v451
    %v729 = vadd.f32 %v728, %v452
    %v731 = vrot.slane %v643, 4
    %v733 = vmul.f32 %v729, %v731
    %735 = vrot.lane.b32.xlu0 %v729, 96
    %v736 = vpop.permute.xlu0 %735
    %v738 = vmul.f32 %v729, %v736
    %740 = vrot.lane.b32.xlu0 %v738, 16
    %v741 = vpop.permute.xlu0 %740
    %v743 = vadd.f32 %v733, %v741
    %v744 = vtanh.pop %v743
    %746 = vrot.lane.b32.xlu0 %v744, 32
    %v747 = vpop.permute.xlu0 %746
    %v749 = vmul.f32 %v729, %v747
    %751 = vrot.lane.b32.xlu0 %v749, 80
    %v752 = vpop.permute.xlu0 %751
    %v753 = vsel %vm453, %v752, 0
    %755 = vmatprep.subr.mxu0 0.0
    %756 = vmatpush1.msra.mxu0 %v33
    %757 = vmatprep.subr.mxu0 0.0
    %758 = vmatpush1.msra.mxu0 %v34
    %759 = vmatprep.subr.mxu0 0.0
    %760 = vmatpush1.msra.mxu0 0.0
    %761 = vmatprep.subr.mxu0 0.0
    %762 = vmatpush1.msra.mxu0 0.0
    %763 = vmatprep.subr.mxu0 0.0
    %764 = vmatpush1.msra.mxu0 0.0
    %765 = vmatprep.subr.mxu0 0.0
    %766 = vmatpush1.msra.mxu0 0.0
    %767 = vmatprep.subr.mxu0 0.0
    %768 = vmatpush1.msra.mxu0 0.0
    %769 = vmatprep.subr.mxu0 0.0
    %770 = vmatpush1.msra.mxu0 0.0
    %771 = vmatprep.subr.mxu0 0.0
    %772 = vmatpush1.msra.mxu0 0.0
    %773 = vmatprep.subr.mxu0 0.0
    %774 = vmatpush1.msra.mxu0 0.0
    %775 = vmatprep.subr.mxu0 0.0
    %776 = vmatpush1.msra.mxu0 0.0
    %777 = vmatprep.subr.mxu0 0.0
    %778 = vmatpush1.msra.mxu0 0.0
    %779 = vmatprep.subr.mxu0 0.0
    %780 = vmatpush1.msra.mxu0 0.0
    %781 = vmatprep.subr.mxu0 0.0
    %782 = vmatpush1.msra.mxu0 0.0
    %783 = vmatprep.subr.mxu0 0.0
    %784 = vmatpush1.msra.mxu0 0.0
    %785 = vmatprep.subr.mxu0 0.0
    %786 = vmatpush1.msra.mxu0 0.0
    %787 = vmatprep.subr.mxu0 0.0
    %788 = vmatpush1.msra.mxu0 0.0
    %789 = vmatprep.subr.mxu0 0.0
    %790 = vmatpush1.msra.mxu0 0.0
    %791 = vmatprep.subr.mxu0 0.0
    %792 = vmatpush1.msra.mxu0 0.0
    %793 = vmatprep.subr.mxu0 0.0
    %794 = vmatpush1.msra.mxu0 0.0
    %795 = vmatprep.subr.mxu0 0.0
    %796 = vmatpush1.msra.mxu0 0.0
    %797 = vmatprep.subr.mxu0 0.0
    %798 = vmatpush1.msra.mxu0 0.0
    %799 = vmatprep.subr.mxu0 0.0
    %800 = vmatpush1.msra.mxu0 0.0
    %801 = vmatprep.subr.mxu0 0.0
    %802 = vmatpush1.msra.mxu0 0.0
    %803 = vmatprep.subr.mxu0 0.0
    %804 = vmatpush1.msra.mxu0 0.0
    %805 = vmatprep.subr.mxu0 0.0
    %806 = vmatpush1.msra.mxu0 0.0
    %807 = vmatprep.subr.mxu0 0.0
    %808 = vmatpush1.msra.mxu0 0.0
    %809 = vmatprep.subr.mxu0 0.0
    %810 = vmatpush1.msra.mxu0 0.0
    %811 = vmatprep.subr.mxu0 0.0
    %812 = vmatpush1.msra.mxu0 0.0
    %813 = vmatprep.subr.mxu0 0.0
    %814 = vmatpush1.msra.mxu0 0.0
    %815 = vmatprep.subr.mxu0 0.0
    %816 = vmatpush1.msra.mxu0 0.0
    %817 = vmatprep.subr.mxu0 0.0
    %818 = vmatpush1.msra.mxu0 0.0
    %819 = vmatprep.mubr.f32.mxu0 0.0
    %820 = vmatmul.mubr.f32.gmra.mrb[0].mxu0 %v753
    %v821 = vpop.f32.mrb[0].mxu0
    %v822 = vadd.f32 0.0, %v821
    %v823 = vpop.f32.mrb[0].mxu0
    %824 = vdwg.mxu0
    %v826 = vrot.slane %v822, 4
    %v828 = vadd.f32 %v433, %v826
    %v829 = vtanh.pop %v828
    %v830 = vmul.f32 %v829, %v451
    %v831 = vadd.f32 %v830, %v452
    %v833 = vrot.slane %v743, 4
    %v835 = vmul.f32 %v831, %v833
    %837 = vrot.lane.b32.xlu0 %v831, 96
    %v838 = vpop.permute.xlu0 %837
    %v840 = vmul.f32 %v831, %v838
    %842 = vrot.lane.b32.xlu0 %v840, 16
    %v843 = vpop.permute.xlu0 %842
    %v845 = vadd.f32 %v835, %v843
    %v846 = vtanh.pop %v845
    %848 = vrot.lane.b32.xlu0 %v846, 32
    %v849 = vpop.permute.xlu0 %848
    %v851 = vmul.f32 %v831, %v849
    %v853 = vrot.slane %v851, 4
    %854 = vrot.lane.b32.xlu0 %v853, 80
    %v855 = vpop.permute.xlu0 %854
    %v856 = vsel %vm453, %v855, 0
    %858 = vmatprep.subr.mxu0 0.0
    %859 = vmatpush1.msra.mxu0 %v33
    %860 = vmatprep.subr.mxu0 0.0
    %861 = vmatpush1.msra.mxu0 %v34
    %862 = vmatprep.subr.mxu0 0.0
    %863 = vmatpush1.msra.mxu0 0.0
    %864 = vmatprep.subr.mxu0 0.0
    %865 = vmatpush1.msra.mxu0 0.0
    %866 = vmatprep.subr.mxu0 0.0
    %867 = vmatpush1.msra.mxu0 0.0
    %868 = vmatprep.subr.mxu0 0.0
    %869 = vmatpush1.msra.mxu0 0.0
    %870 = vmatprep.subr.mxu0 0.0
    %871 = vmatpush1.msra.mxu0 0.0
    %872 = vmatprep.subr.mxu0 0.0
    %873 = vmatpush1.msra.mxu0 0.0
    %874 = vmatprep.subr.mxu0 0.0
    %875 = vmatpush1.msra.mxu0 0.0
    %876 = vmatprep.subr.mxu0 0.0
    %877 = vmatpush1.msra.mxu0 0.0
    %878 = vmatprep.subr.mxu0 0.0
    %879 = vmatpush1.msra.mxu0 0.0
    %880 = vmatprep.subr.mxu0 0.0
    %881 = vmatpush1.msra.mxu0 0.0
    %882 = vmatprep.subr.mxu0 0.0
    %883 = vmatpush1.msra.mxu0 0.0
    %884 = vmatprep.subr.mxu0 0.0
    %885 = vmatpush1.msra.mxu0 0.0
    %886 = vmatprep.subr.mxu0 0.0
    %887 = vmatpush1.msra.mxu0 0.0
    %888 = vmatprep.subr.mxu0 0.0
    %889 = vmatpush1.msra.mxu0 0.0
    %890 = vmatprep.subr.mxu0 0.0
    %891 = vmatpush1.msra.mxu0 0.0
    %892 = vmatprep.subr.mxu0 0.0
    %893 = vmatpush1.msra.mxu0 0.0
    %894 = vmatprep.subr.mxu0 0.0
    %895 = vmatpush1.msra.mxu0 0.0
    %896 = vmatprep.subr.mxu0 0.0
    %897 = vmatpush1.msra.mxu0 0.0
    %898 = vmatprep.subr.mxu0 0.0
    %899 = vmatpush1.msra.mxu0 0.0
    %900 = vmatprep.subr.mxu0 0.0
    %901 = vmatpush1.msra.mxu0 0.0
    %902 = vmatprep.subr.mxu0 0.0
    %903 = vmatpush1.msra.mxu0 0.0
    %904 = vmatprep.subr.mxu0 0.0
    %905 = vmatpush1.msra.mxu0 0.0
    %906 = vmatprep.subr.mxu0 0.0
    %907 = vmatpush1.msra.mxu0 0.0
    %908 = vmatprep.subr.mxu0 0.0
    %909 = vmatpush1.msra.mxu0 0.0
    %910 = vmatprep.subr.mxu0 0.0
    %911 = vmatpush1.msra.mxu0 0.0
    %912 = vmatprep.subr.mxu0 0.0
    %913 = vmatpush1.msra.mxu0 0.0
    %914 = vmatprep.subr.mxu0 0.0
    %915 = vmatpush1.msra.mxu0 0.0
    %916 = vmatprep.subr.mxu0 0.0
    %917 = vmatpush1.msra.mxu0 0.0
    %918 = vmatprep.subr.mxu0 0.0
    %919 = vmatpush1.msra.mxu0 0.0
    %920 = vmatprep.subr.mxu0 0.0
    %921 = vmatpush1.msra.mxu0 0.0
    %922 = vmatprep.mubr.f32.mxu0 0.0
    %923 = vmatmul.mubr.f32.gmra.mrb[0].mxu0 %v856
    %v924 = vpop.f32.mrb[0].mxu0
    %v925 = vadd.f32 0.0, %v924
    %v926 = vpop.f32.mrb[0].mxu0
    %927 = vdwg.mxu0
    %v928 = vadd.f32 %v438, %v925
    %v929 = vtanh.pop %v928
    %v930 = vmul.f32 %v929, %v451
    %v931 = vadd.f32 %v930, %v452
    %v933 = vrot.slane %v845, 4
    %v935 = vmul.f32 %v931, %v933
    %937 = vrot.lane.b32.xlu0 %v931, 96
    %v938 = vpop.permute.xlu0 %937
    %v940 = vmul.f32 %v931, %v938
    %942 = vrot.lane.b32.xlu0 %v940, 16
    %v943 = vpop.permute.xlu0 %942
    %v945 = vadd.f32 %v935, %v943
    %v946 = vtanh.pop %v945
    %948 = vrot.lane.b32.xlu0 %v946, 32
    %v949 = vpop.permute.xlu0 %948
    %v951 = vmul.f32 %v931, %v949
    %953 = vrot.lane.b32.xlu0 %v951, 80
    %v954 = vpop.permute.xlu0 %953
    %v955 = vsel %vm453, %v954, 0
    %957 = vmatprep.subr.mxu0 0.0
    %958 = vmatpush1.msra.mxu0 %v33
    %959 = vmatprep.subr.mxu0 0.0
    %960 = vmatpush1.msra.mxu0 %v34
    %961 = vmatprep.subr.mxu0 0.0
    %962 = vmatpush1.msra.mxu0 0.0
    %963 = vmatprep.subr.mxu0 0.0
    %964 = vmatpush1.msra.mxu0 0.0
    %965 = vmatprep.subr.mxu0 0.0
    %966 = vmatpush1.msra.mxu0 0.0
    %967 = vmatprep.subr.mxu0 0.0
    %968 = vmatpush1.msra.mxu0 0.0
    %969 = vmatprep.subr.mxu0 0.0
    %970 = vmatpush1.msra.mxu0 0.0
    %971 = vmatprep.subr.mxu0 0.0
    %972 = vmatpush1.msra.mxu0 0.0
    %973 = vmatprep.subr.mxu0 0.0
    %974 = vmatpush1.msra.mxu0 0.0
    %975 = vmatprep.subr.mxu0 0.0
    %976 = vmatpush1.msra.mxu0 0.0
    %977 = vmatprep.subr.mxu0 0.0
    %978 = vmatpush1.msra.mxu0 0.0
    %979 = vmatprep.subr.mxu0 0.0
    %980 = vmatpush1.msra.mxu0 0.0
    %981 = vmatprep.subr.mxu0 0.0
    %982 = vmatpush1.msra.mxu0 0.0
    %983 = vmatprep.subr.mxu0 0.0
    %984 = vmatpush1.msra.mxu0 0.0
    %985 = vmatprep.subr.mxu0 0.0
    %986 = vmatpush1.msra.mxu0 0.0
    %987 = vmatprep.subr.mxu0 0.0
    %988 = vmatpush1.msra.mxu0 0.0
    %989 = vmatprep.subr.mxu0 0.0
    %990 = vmatpush1.msra.mxu0 0.0
    %991 = vmatprep.subr.mxu0 0.0
    %992 = vmatpush1.msra.mxu0 0.0
    %993 = vmatprep.subr.mxu0 0.0
    %994 = vmatpush1.msra.mxu0 0.0
    %995 = vmatprep.subr.mxu0 0.0
    %996 = vmatpush1.msra.mxu0 0.0
    %997 = vmatprep.subr.mxu0 0.0
    %998 = vmatpush1.msra.mxu0 0.0
    %999 = vmatprep.subr.mxu0 0.0
    %1000 = vmatpush1.msra.mxu0 0.0
    %1001 = vmatprep.subr.mxu0 0.0
    %1002 = vmatpush1.msra.mxu0 0.0
    %1003 = vmatprep.subr.mxu0 0.0
    %1004 = vmatpush1.msra.mxu0 0.0
    %1005 = vmatprep.subr.mxu0 0.0
    %1006 = vmatpush1.msra.mxu0 0.0
    %1007 = vmatprep.subr.mxu0 0.0
    %1008 = vmatpush1.msra.mxu0 0.0
    %1009 = vmatprep.subr.mxu0 0.0
    %1010 = vmatpush1.msra.mxu0 0.0
    %1011 = vmatprep.subr.mxu0 0.0
    %1012 = vmatpush1.msra.mxu0 0.0
    %1013 = vmatprep.subr.mxu0 0.0
    %1014 = vmatpush1.msra.mxu0 0.0
    %1015 = vmatprep.subr.mxu0 0.0
    %1016 = vmatpush1.msra.mxu0 0.0
    %1017 = vmatprep.subr.mxu0 0.0
    %1018 = vmatpush1.msra.mxu0 0.0
    %1019 = vmatprep.subr.mxu0 0.0
    %1020 = vmatpush1.msra.mxu0 0.0
    %1021 = vmatprep.mubr.f32.mxu0 0.0
    %1022 = vmatmul.mubr.f32.gmra.mrb[0].mxu0 %v955
    %v1023 = vpop.f32.mrb[0].mxu0
    %v1024 = vadd.f32 0.0, %v1023
    %v1025 = vpop.f32.mrb[0].mxu0
    %1026 = vdwg.mxu0
    %v1028 = vrot.slane %v1024, 4
    %v1030 = vadd.f32 %v438, %v1028
    %v1031 = vtanh.pop %v1030
    %v1032 = vmul.f32 %v1031, %v451
    %v1033 = vadd.f32 %v1032, %v452
    %v1035 = vrot.slane %v945, 4
    %v1037 = vmul.f32 %v1033, %v1035
    %1039 = vrot.lane.b32.xlu0 %v1033, 96
    %v1040 = vpop.permute.xlu0 %1039
    %v1042 = vmul.f32 %v1033, %v1040
    %1044 = vrot.lane.b32.xlu0 %v1042, 16
    %v1045 = vpop.permute.xlu0 %1044
    %v1047 = vadd.f32 %v1037, %v1045
    %v1048 = vtanh.pop %v1047
    %1050 = vrot.lane.b32.xlu0 %v1048, 32
    %v1051 = vpop.permute.xlu0 %1050
    %v1053 = vmul.f32 %v1033, %v1051
    %v1055 = vrot.slane %v1053, 4
    %1056 = vrot.lane.b32.xlu0 %v1055, 80
    %v1057 = vpop.permute.xlu0 %1056
    %v1058 = vsel %vm453, %v1057, 0
    %1060 = vmatprep.subr.mxu0 0.0
    %1061 = vmatpush1.msra.mxu0 %v33
    %1062 = vmatprep.subr.mxu0 0.0
    %1063 = vmatpush1.msra.mxu0 %v34
    %1064 = vmatprep.subr.mxu0 0.0
    %1065 = vmatpush1.msra.mxu0 0.0
    %1066 = vmatprep.subr.mxu0 0.0
    %1067 = vmatpush1.msra.mxu0 0.0
    %1068 = vmatprep.subr.mxu0 0.0
    %1069 = vmatpush1.msra.mxu0 0.0
    %1070 = vmatprep.subr.mxu0 0.0
    %1071 = vmatpush1.msra.mxu0 0.0
    %1072 = vmatprep.subr.mxu0 0.0
    %1073 = vmatpush1.msra.mxu0 0.0
    %1074 = vmatprep.subr.mxu0 0.0
    %1075 = vmatpush1.msra.mxu0 0.0
    %1076 = vmatprep.subr.mxu0 0.0
    %1077 = vmatpush1.msra.mxu0 0.0
    %1078 = vmatprep.subr.mxu0 0.0
    %1079 = vmatpush1.msra.mxu0 0.0
    %1080 = vmatprep.subr.mxu0 0.0
    %1081 = vmatpush1.msra.mxu0 0.0
    %1082 = vmatprep.subr.mxu0 0.0
    %1083 = vmatpush1.msra.mxu0 0.0
    %1084 = vmatprep.subr.mxu0 0.0
    %1085 = vmatpush1.msra.mxu0 0.0
    %1086 = vmatprep.subr.mxu0 0.0
    %1087 = vmatpush1.msra.mxu0 0.0
    %1088 = vmatprep.subr.mxu0 0.0
    %1089 = vmatpush1.msra.mxu0 0.0
    %1090 = vmatprep.subr.mxu0 0.0
    %1091 = vmatpush1.msra.mxu0 0.0
    %1092 = vmatprep.subr.mxu0 0.0
    %1093 = vmatpush1.msra.mxu0 0.0
    %1094 = vmatprep.subr.mxu0 0.0
    %1095 = vmatpush1.msra.mxu0 0.0
    %1096 = vmatprep.subr.mxu0 0.0
    %1097 = vmatpush1.msra.mxu0 0.0
    %1098 = vmatprep.subr.mxu0 0.0
    %1099 = vmatpush1.msra.mxu0 0.0
    %1100 = vmatprep.subr.mxu0 0.0
    %1101 = vmatpush1.msra.mxu0 0.0
    %1102 = vmatprep.subr.mxu0 0.0
    %1103 = vmatpush1.msra.mxu0 0.0
    %1104 = vmatprep.subr.mxu0 0.0
    %1105 = vmatpush1.msra.mxu0 0.0
    %1106 = vmatprep.subr.mxu0 0.0
    %1107 = vmatpush1.msra.mxu0 0.0
    %1108 = vmatprep.subr.mxu0 0.0
    %1109 = vmatpush1.msra.mxu0 0.0
    %1110 = vmatprep.subr.mxu0 0.0
    %1111 = vmatpush1.msra.mxu0 0.0
    %1112 = vmatprep.subr.mxu0 0.0
    %1113 = vmatpush1.msra.mxu0 0.0
    %1114 = vmatprep.subr.mxu0 0.0
    %1115 = vmatpush1.msra.mxu0 0.0
    %1116 = vmatprep.subr.mxu0 0.0
    %1117 = vmatpush1.msra.mxu0 0.0
    %1118 = vmatprep.subr.mxu0 0.0
    %1119 = vmatpush1.msra.mxu0 0.0
    %1120 = vmatprep.subr.mxu0 0.0
    %1121 = vmatpush1.msra.mxu0 0.0
    %1122 = vmatprep.subr.mxu0 0.0
    %1123 = vmatpush1.msra.mxu0 0.0
    %1124 = vmatprep.mubr.f32.mxu0 0.0
    %1125 = vmatmul.mubr.f32.gmra.mrb[0].mxu0 %v1058
    %v1126 = vpop.f32.mrb[0].mxu0
    %v1127 = vadd.f32 0.0, %v1126
    %v1128 = vpop.f32.mrb[0].mxu0
    %1129 = vdwg.mxu0
    %v1130 = vadd.f32 %v443, %v1127
    %v1131 = vtanh.pop %v1130
    %v1132 = vmul.f32 %v1131, %v451
    %v1133 = vadd.f32 %v1132, %v452
    %v1135 = vrot.slane %v1047, 4
    %v1137 = vmul.f32 %v1133, %v1135
    %1139 = vrot.lane.b32.xlu0 %v1133, 96
    %v1140 = vpop.permute.xlu0 %1139
    %v1142 = vmul.f32 %v1133, %v1140
    %1144 = vrot.lane.b32.xlu0 %v1142, 16
    %v1145 = vpop.permute.xlu0 %1144
    %v1147 = vadd.f32 %v1137, %v1145
    %v1148 = vtanh.pop %v1147
    %1150 = vrot.lane.b32.xlu0 %v1148, 32
    %v1151 = vpop.permute.xlu0 %1150
    %v1153 = vmul.f32 %v1133, %v1151
    %1155 = vrot.lane.b32.xlu0 %v1153, 80
    %v1156 = vpop.permute.xlu0 %1155
    %v1157 = vsel %vm453, %v1156, 0
    %1159 = vmatprep.subr.mxu0 0.0
    %1160 = vmatpush1.msra.mxu0 %v33
    %1161 = vmatprep.subr.mxu0 0.0
    %1162 = vmatpush1.msra.mxu0 %v34
    %1163 = vmatprep.subr.mxu0 0.0
    %1164 = vmatpush1.msra.mxu0 0.0
    %1165 = vmatprep.subr.mxu0 0.0
    %1166 = vmatpush1.msra.mxu0 0.0
    %1167 = vmatprep.subr.mxu0 0.0
    %1168 = vmatpush1.msra.mxu0 0.0
    %1169 = vmatprep.subr.mxu0 0.0
    %1170 = vmatpush1.msra.mxu0 0.0
    %1171 = vmatprep.subr.mxu0 0.0
    %1172 = vmatpush1.msra.mxu0 0.0
    %1173 = vmatprep.subr.mxu0 0.0
    %1174 = vmatpush1.msra.mxu0 0.0
    %1175 = vmatprep.subr.mxu0 0.0
    %1176 = vmatpush1.msra.mxu0 0.0
    %1177 = vmatprep.subr.mxu0 0.0
    %1178 = vmatpush1.msra.mxu0 0.0
    %1179 = vmatprep.subr.mxu0 0.0
    %1180 = vmatpush1.msra.mxu0 0.0
    %1181 = vmatprep.subr.mxu0 0.0
    %1182 = vmatpush1.msra.mxu0 0.0
    %1183 = vmatprep.subr.mxu0 0.0
    %1184 = vmatpush1.msra.mxu0 0.0
    %1185 = vmatprep.subr.mxu0 0.0
    %1186 = vmatpush1.msra.mxu0 0.0
    %1187 = vmatprep.subr.mxu0 0.0
    %1188 = vmatpush1.msra.mxu0 0.0
    %1189 = vmatprep.subr.mxu0 0.0
    %1190 = vmatpush1.msra.mxu0 0.0
    %1191 = vmatprep.subr.mxu0 0.0
    %1192 = vmatpush1.msra.mxu0 0.0
    %1193 = vmatprep.subr.mxu0 0.0
    %1194 = vmatpush1.msra.mxu0 0.0
    %1195 = vmatprep.subr.mxu0 0.0
    %1196 = vmatpush1.msra.mxu0 0.0
    %1197 = vmatprep.subr.mxu0 0.0
    %1198 = vmatpush1.msra.mxu0 0.0
    %1199 = vmatprep.subr.mxu0 0.0
    %1200 = vmatpush1.msra.mxu0 0.0
    %1201 = vmatprep.subr.mxu0 0.0
    %1202 = vmatpush1.msra.mxu0 0.0
    %1203 = vmatprep.subr.mxu0 0.0
    %1204 = vmatpush1.msra.mxu0 0.0
    %1205 = vmatprep.subr.mxu0 0.0
    %1206 = vmatpush1.msra.mxu0 0.0
    %1207 = vmatprep.subr.mxu0 0.0
    %1208 = vmatpush1.msra.mxu0 0.0
    %1209 = vmatprep.subr.mxu0 0.0
    %1210 = vmatpush1.msra.mxu0 0.0
    %1211 = vmatprep.subr.mxu0 0.0
    %1212 = vmatpush1.msra.mxu0 0.0
    %1213 = vmatprep.subr.mxu0 0.0
    %1214 = vmatpush1.msra.mxu0 0.0
    %1215 = vmatprep.subr.mxu0 0.0
    %1216 = vmatpush1.msra.mxu0 0.0
    %1217 = vmatprep.subr.mxu0 0.0
    %1218 = vmatpush1.msra.mxu0 0.0
    %1219 = vmatprep.subr.mxu0 0.0
    %1220 = vmatpush1.msra.mxu0 0.0
    %1221 = vmatprep.subr.mxu0 0.0
    %1222 = vmatpush1.msra.mxu0 0.0
    %1223 = vmatprep.mubr.f32.mxu0 0.0
    %1224 = vmatmul.mubr.f32.gmra.mrb[0].mxu0 %v1157
    %v1225 = vpop.f32.mrb[0].mxu0
    %v1226 = vadd.f32 0.0, %v1225
    %v1227 = vpop.f32.mrb[0].mxu0
    %1228 = vdwg.mxu0
    %v1230 = vrot.slane %v1226, 4
    %v1232 = vadd.f32 %v443, %v1230
    %v1233 = vtanh.pop %v1232
    %v1234 = vmul.f32 %v1233, %v451
    %v1235 = vadd.f32 %v1234, %v452
    %v1237 = vrot.slane %v1147, 4
    %v1239 = vmul.f32 %v1235, %v1237
    %1241 = vrot.lane.b32.xlu0 %v1235, 96
    %v1242 = vpop.permute.xlu0 %1241
    %v1244 = vmul.f32 %v1235, %v1242
    %1246 = vrot.lane.b32.xlu0 %v1244, 16
    %v1247 = vpop.permute.xlu0 %1246
    %v1249 = vadd.f32 %v1239, %v1247
    %v1250 = vtanh.pop %v1249
    %1252 = vrot.lane.b32.xlu0 %v1250, 32
    %v1253 = vpop.permute.xlu0 %1252
    %v1255 = vmul.f32 %v1235, %v1253
    %v1257 = vrot.slane %v342, 4
    %1258 = vrot.lane.b32.xlu0 %v1257, 48
    %v1259 = vpop.permute.xlu0 %1258
    %v1261 = vmul.f32 %v1255, %v1259
    %1263 = vrot.lane.b32.xlu0 %v1261, 80
    %v1264 = vpop.permute.xlu0 %1263
    %vm1266 = vcmask 130052
    %v1267 = vsel %vm1266, %v1264, 0.0
    %1268 = vadd.xlane.f32.xlu0 %v1267
    %v1269 = vpop.xlane.xlu0 %1268
    %v1271 = vadd.s32 %v447, 4
    %v1272 = vlaneseq
    %v1273 = vshrl.u32 %v1272, 7
    %v1274 = vsub.s32 %v1271, %v1273
    %v1275 = vrot.slane %v1269, %v1274
    %vm1277 = vcmask 28676
    %1278 = vst.msk [vmem:[#allocation2 - $0x4] sm:$0x10] %vm1277, %v1275
    // Predicated region
    $region10: #{tpu_custom_call.1} parent=1 // pred_check
      _
    $region11: #{tpu_custom_call.1} parent=1 // pred_check_branch
      %1280 = sbr.rel (0) target = $region13
    $region12: #{tpu_custom_call.1} parent=1 // pred_region
      %s1282 = ssub.s32 16, 16
      %1283 = vsyncadd [#allocation3], %s1282
      %s1285 = sshll.u32 [#allocation2], 4
      %s1286 = int_to_ptr.vmem [resolvable:$true] %s1285
      %1288 = dma.vmem_to_hbm [thread:$0]  %s1286, 16, %s2, [#allocation3]
    $region13: #{tpu_custom_call.1} parent=1 // pred_fallthru
      _
    // Predicated region
    $region14: #{tpu_custom_call.1} parent=1 // pred_check
      _
    $region15: #{tpu_custom_call.1} parent=1 // pred_check_branch
      %1290 = sbr.rel (0) target = $region17
    $region16: #{tpu_custom_call.1} parent=1 // pred_region
      %1291 = dma.done [#allocation3], 16
    $region17: #{tpu_custom_call.1} parent=1 // pred_fallthru
      _
    %1292 = vsyncpa [#allocation3], 1

</llo_original>
